<compile_context>
chip_gen: v6e
topology: v6e:2x2x1
jax: 0.10.0
libtpu: 0.0.40
codegen_flags: <defaults>
</compile_context>

<pallas_src>
import math

import jax
import jax.numpy as jnp
from jax import lax
from jax.experimental import pallas as pl
from jax.experimental.pallas import tpu as pltpu


OUT_LANES = 128


def _round_up(x, m):
    return (x + m - 1) // m * m


# ------------------------------ host-side packing ------------------------------

def _shelf_pack(entries, row_align=8, col_align=128):
    """2-D shelf packing of (name, 2-D array) blocks into one lane-padded f32 slab.

    Every block starts on an 8-row / 128-lane boundary so all in-kernel loads are
    tile-aligned.  Returns (slab, offs) with offs[name] = (row, col, nrows, ncols).
    """
    entries = sorted(
        entries,
        key=lambda kv: (-_round_up(kv[1].shape[0], row_align),
                        -_round_up(kv[1].shape[1], col_align)))
    slab_lanes = max(_round_up(a.shape[1], col_align) for _, a in entries)
    shelves = []          # [row_start, height, next_free_col]
    offs, placed, n_rows = {}, [], 0
    for name, a in entries:
        nr, nc = a.shape
        h = _round_up(nr, row_align)
        w = _round_up(nc, col_align)
        slot = None
        for sh in shelves:
            if h <= sh[1] and sh[2] + w <= slab_lanes:
                slot = sh
                break
        if slot is None:
            slot = [n_rows, h, 0]
            shelves.append(slot)
            n_rows += h
        r, c = slot[0], slot[2]
        slot[2] += w
        offs[name] = (r, c, nr, nc)
        placed.append((r, c, a))
    slab = jnp.zeros((n_rows, slab_lanes), jnp.float32)
    for r, c, a in placed:
        slab = slab.at[r:r + a.shape[0], c:c + a.shape[1]].set(
            jnp.asarray(a, jnp.float32))
    return slab, offs


def pack_weight_slab(p):
    """Fuse + shelf-pack all weights/biases into one lane-padded f32 slab."""
    f32 = lambda a: jnp.asarray(a, jnp.float32)
    cat = lambda *xs: jnp.concatenate([f32(x) for x in xs], axis=1)
    entries = [
        # CA1 K|V and CA2 K|V fused over output lanes; LHS = [x_s ; x_l].
        ("w_mkv", cat(p["c1_wk"], p["c1_wv"], p["c2_wk"], p["c2_wv"])),
        ("b_mkv", cat(p["c1_bk"], p["c1_bv"], p["c2_bk"], p["c2_bv"])),
        # CA2 query and prototype-MLP layer 1 fused; LHS = text_low.
        ("w_tq", cat(p["c2_wq"], p["pm_w1"])),
        ("b_tq", cat(p["c2_bq"], p["pm_b1"])),
        # prototype-MLP layer 2 and the prefolded CA1 query projection; LHS = h1.
        ("w_pm2q", cat(p["pm_w2"], f32(p["pm_w2"]) @ f32(p["c1_wq"]))),
        ("b_pm2q", cat(p["pm_b2"],
                       f32(p["pm_b2"]) @ f32(p["c1_wq"]) + f32(p["c1_bq"]))),
        # gated-MIL V|U gates + a copy of CA2's K|V projection; LHS = comp_both.
        ("w_cg", cat(p["av_w"], p["au_w"], p["c2_wk"], p["c2_wv"])),
        ("b_cg", cat(p["av_b"], p["au_b"], p["c2_bk"], p["c2_bv"])),
        ("c1_wo", f32(p["c1_wo"])), ("c1_bo", f32(p["c1_bo"])),
        ("c2_wo", f32(p["c2_wo"])), ("c2_bo", f32(p["c2_bo"])),
        ("ln_g", f32(p["ln_g"])), ("ln_b", f32(p["ln_b"])),
        ("aw_row", f32(p["aw_w"]).T), ("aw_b", f32(p["aw_b"])),
    ]
    return _shelf_pack(entries)


def pack_activation_slab(x_s, x_l, text_low):
    """[x_s ; x_l ; (pad) ; text_low ; (pad)] as one (rows, L) f32 slab."""
    Ns, L = x_s.shape
    Nl = x_l.shape[0]
    C = text_low.shape[0]
    txt_off = _round_up(Ns + Nl, 8)
    total = _round_up(txt_off + C, 8)
    slab = jnp.zeros((total, L), jnp.float32)
    slab = slab.at[:Ns].set(x_s.astype(jnp.float32))
    slab = slab.at[Ns:Ns + Nl].set(x_l.astype(jnp.float32))
    slab = slab.at[txt_off:txt_off + C].set(text_low.astype(jnp.float32))
    return slab, txt_off


# --------------------------------- the kernel ----------------------------------

def make_explainer_kernel(offs, txt_off, Ns, Nl, C, PPC, L, D, out_lanes):
    Nk = Ns + Nl
    scale = 1.0 / math.sqrt(L)
    log_ppc = float(math.log(PPC))
    NEG_INF = float("-inf")

    def ws(w_ref, name):
        r, c, nr, nc = offs[name]
        return w_ref[pl.ds(r, nr), pl.ds(c, nc)]

    def kernel(label_ref, acts_ref, w_ref, out_ref):
        M_both = acts_ref[pl.ds(0, Nk), :]                 # (Nk, L)  [x_s ; x_l]
        text_low = acts_ref[pl.ds(txt_off, C), :]          # (C, L)

        # ---- text-side fused projections ----
        tq = (jnp.dot(text_low, ws(w_ref, "w_tq"),
                      preferred_element_type=jnp.float32) + ws(w_ref, "b_tq"))
        Q2 = tq[:, :L]                                     # (C, L)
        h1 = jnp.maximum(tq[:, L:L + D], 0.0)              # (C, D)
        pq = (jnp.dot(h1, ws(w_ref, "w_pm2q"),
                      preferred_element_type=jnp.float32) + ws(w_ref, "b_pm2q"))
        protos = pq[:, :L]                                 # (C, L) prototype features
        Q1 = pq[:, L:2 * L]                                # (C, L) prefolded CA1 query

        # ---- fused K|V for CA1 (all instances) and CA2 (x_s part) ----
        mkv = (jnp.dot(M_both, ws(w_ref, "w_mkv"),
                       preferred_element_type=jnp.float32) + ws(w_ref, "b_mkv"))
        K1 = mkv[:, :L]
        V1 = mkv[:, L:2 * L]

        # ---- cross_attention_1: both bags via one masked softmax + one matmul ----
        s1 = lax.dot_general(Q1, K1, (((1,), (1,)), ((), ())),
                             preferred_element_type=jnp.float32) * scale    # (C, Nk)
        s1b = jnp.concatenate([s1, s1], axis=0)                             # (2C, Nk)
        row = lax.broadcasted_iota(jnp.int32, (2 * C, 1), 0)
        col = lax.broadcasted_iota(jnp.int32, (1, Nk), 1)
        keep = ((row < C) & (col < Ns)) | ((row >= C) & (col >= Ns))
        s1m = jnp.where(keep, s1b, NEG_INF)
        m1 = jnp.max(s1m, axis=-1, keepdims=True)
        e1 = jnp.exp(s1m - m1)
        a1 = e1 * pl.reciprocal(jnp.sum(e1, axis=-1, keepdims=True), approx=True)
        attn = jnp.dot(a1, V1, preferred_element_type=jnp.float32)          # (2C, L)

        # out-proj + residual + LayerNorm (both branches stacked)
        protos2 = jnp.concatenate([protos, protos], axis=0)
        x = (jnp.dot(attn, ws(w_ref, "c1_wo"),
                     preferred_element_type=jnp.float32)
             + ws(w_ref, "c1_bo") + protos2)
        mu = jnp.mean(x, axis=-1, keepdims=True)
        var = jnp.mean((x - mu) ** 2, axis=-1, keepdims=True)
        comp = ((x - mu) * lax.rsqrt(var + 1e-5) * ws(w_ref, "ln_g")
                + ws(w_ref, "ln_b"))                                        # (2C, L)

        # ---- gated-MIL gates + CA2 K|V of prototype keys, one fused matmul ----
        g = (jnp.dot(comp, ws(w_ref, "w_cg"),
                     preferred_element_type=jnp.float32) + ws(w_ref, "b_cg"))
        gated = jnp.tanh(g[:, :D]) * jax.nn.sigmoid(g[:, D:2 * D])          # (2C, D)
        A = (jnp.sum(gated * ws(w_ref, "aw_row"), axis=-1, keepdims=True)
             + ws(w_ref, "aw_b"))                                           # (2C, 1)

        # per-branch MIL softmax over the C deduplicated prototypes (exact:
        # duplicated prototype rows have identical logits and features, so this
        # equals the reference softmax-over-P pooling).
        is_low = row < C
        m_lo = jnp.max(jnp.where(is_low, A, NEG_INF), axis=0, keepdims=True)
        m_hi = jnp.max(jnp.where(is_low, NEG_INF, A), axis=0, keepdims=True)
        e = jnp.exp(A - jnp.where(is_low, m_lo, m_hi))
        s_lo = jnp.sum(jnp.where(is_low, e, 0.0), axis=0, keepdims=True)
        s_hi = jnp.sum(jnp.where(is_low, 0.0, e), axis=0, keepdims=True)
        wts = e * jnp.where(is_low, pl.reciprocal(s_lo, approx=True),
                            pl.reciprocal(s_hi, approx=True))
        img_sum = jnp.sum(wts * comp, axis=0, keepdims=True)                # (1, L)

        # ---- cross_attention_2 (low branch; the high branch is dead code for the
        #      returned outputs).  Prototype-key multiplicity (PPC identical copies
        #      in the reference ctx) folds into a +log(PPC) score bias.
        kv2 = jnp.concatenate(
            [g[:C, 2 * D:2 * D + 2 * L], mkv[:Ns, 2 * L:4 * L]], axis=0)    # (C+Ns, 2L)
        K2 = kv2[:, :L]
        V2 = kv2[:, L:2 * L]
        s2 = lax.dot_general(Q2, K2, (((1,), (1,)), ((), ())),
                             preferred_element_type=jnp.float32) * scale    # (C, C+Ns)
        col2 = lax.broadcasted_iota(jnp.int32, (1, C + Ns), 1)
        s2 = s2 + jnp.where(col2 < C, log_ppc, 0.0)
        m2 = jnp.max(s2, axis=-1, keepdims=True)
        e2 = jnp.exp(s2 - m2)
        a2 = e2 * pl.reciprocal(jnp.sum(e2, axis=-1, keepdims=True), approx=True)
        o2 = jnp.dot(a2, V2, preferred_element_type=jnp.float32)            # (C, L)
        text_feat_low = (jnp.dot(o2, ws(w_ref, "c2_wo"),
                                 preferred_element_type=jnp.float32)
                         + ws(w_ref, "c2_bo") + text_low)                   # (C, L)

        # ---- logits, probabilities, CE loss -> one lane-dense output row ----
        logits = lax.dot_general(img_sum, text_feat_low, (((1,), (1,)), ((), ())),
                                 preferred_element_type=jnp.float32)        # (1, C)
        m = jnp.max(logits, axis=-1, keepdims=True)
        ex = jnp.exp(logits - m)
        Z = jnp.sum(ex, axis=-1, keepdims=True)
        y_prob = ex / Z                               # exact normalization
        logp = logits - m - jnp.log(Z)
        label = label_ref[0]
        lc = lax.broadcasted_iota(jnp.int32, (1, C), 1)
        loss = -jnp.sum(jnp.where(lc == label, logp, 0.0), axis=-1, keepdims=True)
        pad = jnp.zeros((1, out_lanes - C - 1), jnp.float32)
        out_ref[...] = jnp.concatenate([y_prob, loss, pad], axis=1)

    return kernel


# --------------------------------- the wrapper ----------------------------------

def explainer_forward(x_s, x_l, label, text_features, params,
                      num_classes, prototypes_per_class):
    C = num_classes
    PPC = prototypes_per_class
    Ns, L = x_s.shape
    Nl = x_l.shape[0]
    D = params["pm_w1"].shape[1]
    assert C + 1 <= OUT_LANES

    text_low = text_features[:C].astype(jnp.float32)
    # In production the weight slab is packed once at model init and reused.
    wslab, offs = pack_weight_slab(params)
    acts, txt_off = pack_activation_slab(x_s, x_l, text_low)
    label_arr = jnp.asarray(label, jnp.int32).reshape(1)

    kernel = make_explainer_kernel(offs, txt_off, Ns, Nl, C, PPC, L, D, OUT_LANES)

    grid_spec = pltpu.PrefetchScalarGridSpec(
        num_scalar_prefetch=1,                 # label -> SMEM scalar
        grid=(1,),
        in_specs=[
            pl.BlockSpec(acts.shape, lambda i, lbl: (0, 0)),
            pl.BlockSpec(wslab.shape, lambda i, lbl: (0, 0)),
        ],
        out_specs=pl.BlockSpec((1, OUT_LANES), lambda i, lbl: (0, 0)),
    )

    out = pl.pallas_call(
        kernel,
        out_shape=jax.ShapeDtypeStruct((1, OUT_LANES), jnp.float32),
        grid_spec=grid_spec,
        compiler_params=pltpu.CompilerParams(
            dimension_semantics=("arbitrary",)),
    )(label_arr, acts, wslab)

    y_prob = out[:, :C]
    loss = out[0, C]
    y_hat = jnp.argmax(y_prob, axis=1)         # glue: topk(k=1) == argmax
    return y_prob, y_hat, loss


# -------------------- pure-JAX reference (mirrors the PyTorch) -------------------

def reference_forward(x_s, x_l, label, text_features, p, C, PPC):
    L = x_s.shape[1]
    scale = 1.0 / math.sqrt(L)

    def mha(q, kv, pre):
        Q = q @ p[pre + "_wq"] + p[pre + "_bq"]
        K = kv @ p[pre + "_wk"] + p[pre + "_bk"]
        V = kv @ p[pre + "_wv"] + p[pre + "_bv"]
        a = jax.nn.softmax(Q @ K.T * scale, axis=-1)
        return (a @ V) @ p[pre + "_wo"] + p[pre + "_bo"]

    def ln(x):
        mu = x.mean(-1, keepdims=True)
        var = ((x - mu) ** 2).mean(-1, keepdims=True)
        return (x - mu) / jnp.sqrt(var + 1e-5) * p["ln_g"] + p["ln_b"]

    text_low = text_features[:C].astype(jnp.float32)
    text_exp = jnp.repeat(text_low, PPC, axis=0)
    protos = (jnp.maximum(text_exp @ p["pm_w1"] + p["pm_b1"], 0.0)
              @ p["pm_w2"] + p["pm_b2"])

    def branch(M):
        comp = ln(mha(protos, M, "c1") + protos)
        gated = (jnp.tanh(comp @ p["av_w"] + p["av_b"])
                 * jax.nn.sigmoid(comp @ p["au_w"] + p["au_b"]))
        A = gated @ p["aw_w"] + p["aw_b"]                 # (P, 1)
        w = jax.nn.softmax(A.T, axis=1)                   # (1, P)
        return w @ comp, comp

    img_low, comp_low = branch(x_s.astype(jnp.float32))
    img_high, _ = branch(x_l.astype(jnp.float32))

    ctx = jnp.concatenate([comp_low, x_s.astype(jnp.float32)], axis=0)
    text_feat_low = mha(text_low, ctx, "c2") + text_low

    logits = (img_low + img_high) @ text_feat_low.T       # (1, C)
    y_prob = jax.nn.softmax(logits, axis=1)
    loss = -jax.nn.log_softmax(logits, axis=1)[0, label]
    y_hat = jnp.argmax(y_prob, axis=1)
    return y_prob, y_hat, loss


# ----------------------------- deterministic setup ------------------------------

def make_params(key, L, D):
    ks = jax.random.split(key, 32)
    s = 0.05
    n = lambda k, shape: (s * jax.random.normal(k, shape)).astype(jnp.float32)
    z = lambda shape: jnp.zeros(shape, jnp.float32)
    return {
        # prototype_mlp (weights in x@W convention)
        "pm_w1": n(ks[0], (L, D)), "pm_b1": z((1, D)),
        "pm_w2": n(ks[1], (D, L)), "pm_b2": z((1, L)),
        # cross_attention_1
        "c1_wq": n(ks[2], (L, L)), "c1_wk": n(ks[3], (L, L)),
        "c1_wv": n(ks[4], (L, L)), "c1_wo": n(ks[5], (L, L)),
        "c1_bq": z((1, L)), "c1_bk": z((1, L)),
        "c1_bv": z((1, L)), "c1_bo": z((1, L)),
        # cross_attention_2
        "c2_wq": n(ks[6], (L, L)), "c2_wk": n(ks[7], (L, L)),
        "c2_wv": n(ks[8], (L, L)), "c2_wo": n(ks[9], (L, L)),
        "c2_bq": z((1, L)), "c2_bk": z((1, L)),
        "c2_bv": z((1, L)), "c2_bo": z((1, L)),
        # LayerNorm
        "ln_g": jnp.ones((1, L), jnp.float32), "ln_b": z((1, L)),
        # gated-attention MIL
        "av_w": n(ks[10], (L, D)), "av_b": z((1, D)),
        "au_w": n(ks[11], (L, D)), "au_b": z((1, D)),
        "aw_w": n(ks[12], (D, 1)), "aw_b": z((1, 1)),
    }


if __name__ == "__main__":
    # small shapes consistent with the module:
    L = 64            # config.input_size (embed dim)
    D = 32            # config.hidden_size
    C = 3             # num_classes
    PPC = 2           # config.prototype_number (prototypes per class)
    Ns, Nl = 16, 12   # instances in the low-res / high-res bags

    key = jax.random.PRNGKey(0)
    k_xs, k_xl, k_txt, k_par = jax.random.split(key, 4)

    x_s = jax.random.normal(k_xs, (Ns, L), dtype=jnp.float32)
    x_l = jax.random.normal(k_xl, (Nl, L), dtype=jnp.float32)
    # synthetic stand-in for the CLIP text encoder output (2*C prompts: low + high)
    text_features = jax.random.normal(k_txt, (2 * C, L), dtype=jnp.float32)
    label = jnp.array(1, dtype=jnp.int32)

    params = make_params(k_par, L, D)

    y_prob, y_hat, loss = explainer_forward(
        x_s, x_l, label, text_features, params,
        num_classes=C, prototypes_per_class=PPC)
    jax.block_until_ready((y_prob, y_hat, loss))

    # correctness against the non-deduplicated, non-fused reference
    y_prob_ref, y_hat_ref, loss_ref = reference_forward(
        x_s, x_l, int(label), text_features, params, C, PPC)

    assert y_prob.shape == (1, C) and y_hat.shape == (1,)
    assert bool(jnp.all(jnp.isfinite(y_prob))) and bool(jnp.isfinite(loss))
    assert float(jnp.max(jnp.abs(y_prob - y_prob_ref))) < 2e-2
    assert float(jnp.abs(loss - loss_ref)) < 2e-2
    print("KERNEL_OK")
</pallas_src>

<mosaic_0001>
module attributes {stable_mosaic.version = 11 : i64} {
  func.func @kernel(%arg0: i32, %arg1: memref<1xi32, #tpu.memory_space<smem>>, %arg2: memref<40x64xf32, #tpu.memory_space<vmem>>, %arg3: memref<304x256xf32, #tpu.memory_space<vmem>>, %arg4: memref<1x128xf32, #tpu.memory_space<vmem>>) attributes {dimension_semantics = [#tpu.dimension_semantics<arbitrary>], iteration_bounds = array<i64: 1>, scalar_prefetch = 1 : i64, scratch_operands = 0 : i64, tpu.core_type = #tpu.core_type<tc>, window_params = [{pipeline_mode = #tpu.pipeline_mode<synchronous>, transform_indices = @transform_0, window_bounds = array<i64: 40, 64>}, {pipeline_mode = #tpu.pipeline_mode<synchronous>, transform_indices = @transform_1, window_bounds = array<i64: 304, 256>}, {pipeline_mode = #tpu.pipeline_mode<synchronous>, transform_indices = @transform_2, window_bounds = array<i64: 1, 128>}]} {
    %c0 = arith.constant 0 : index
    %c0_0 = arith.constant 0 : index
    %0 = vector.load %arg2[%c0, %c0_0] : memref<40x64xf32, #tpu.memory_space<vmem>>, vector<28x64xf32>
    %c32 = arith.constant 32 : index
    %c0_1 = arith.constant 0 : index
    %1 = vector.load %arg2[%c32, %c0_1] : memref<40x64xf32, #tpu.memory_space<vmem>>, vector<3x64xf32>
    %c128 = arith.constant 128 : index
    %c0_2 = arith.constant 0 : index
    %2 = vector.load %arg3[%c128, %c0_2] : memref<304x256xf32, #tpu.memory_space<vmem>>, vector<64x96xf32>
    %cst = arith.constant dense<0.000000e+00> : vector<3x96xf32>
    %3 = tpu.matmul %1, %2, %cst {dimension_numbers = #tpu.dot_dimension_numbers<[1], [0], [0], [1], [0, 0, 1, 1], [], []>} : vector<3x64xf32>, vector<64x96xf32>, vector<3x96xf32> -> vector<3x96xf32>
    %c272 = arith.constant 272 : index
    %c0_3 = arith.constant 0 : index
    %4 = vector.load %arg3[%c272, %c0_3] : memref<304x256xf32, #tpu.memory_space<vmem>>, vector<1x96xf32>
    %5 = vector.broadcast %4 : vector<1x96xf32> to vector<3x96xf32>
    %6 = arith.addf %3, %5 : vector<3x96xf32>
    %7 = vector.extract_strided_slice %6 {offsets = [0, 0], sizes = [3, 64], strides = [1, 1]} : vector<3x96xf32> to vector<3x64xf32>
    %8 = vector.extract_strided_slice %6 {offsets = [0, 64], sizes = [3, 32], strides = [1, 1]} : vector<3x96xf32> to vector<3x32xf32>
    %cst_4 = arith.constant 0.000000e+00 : f32
    %9 = vector.broadcast %cst_4 : f32 to vector<3x32xf32>
    %10 = arith.maximumf %8, %9 : vector<3x32xf32>
    %c192 = arith.constant 192 : index
    %c128_5 = arith.constant 128 : index
    %11 = vector.load %arg3[%c192, %c128_5] : memref<304x256xf32, #tpu.memory_space<vmem>>, vector<32x128xf32>
    %cst_6 = arith.constant dense<0.000000e+00> : vector<3x128xf32>
    %12 = tpu.matmul %10, %11, %cst_6 {dimension_numbers = #tpu.dot_dimension_numbers<[1], [0], [0], [1], [0, 0, 1, 1], [], []>} : vector<3x32xf32>, vector<32x128xf32>, vector<3x128xf32> -> vector<3x128xf32>
    %c272_7 = arith.constant 272 : index
    %c128_8 = arith.constant 128 : index
    %13 = vector.load %arg3[%c272_7, %c128_8] : memref<304x256xf32, #tpu.memory_space<vmem>>, vector<1x128xf32>
    %14 = vector.broadcast %13 : vector<1x128xf32> to vector<3x128xf32>
    %15 = arith.addf %12, %14 : vector<3x128xf32>
    %16 = vector.extract_strided_slice %15 {offsets = [0, 0], sizes = [3, 64], strides = [1, 1]} : vector<3x128xf32> to vector<3x64xf32>
    %17 = vector.extract_strided_slice %15 {offsets = [0, 64], sizes = [3, 64], strides = [1, 1]} : vector<3x128xf32> to vector<3x64xf32>
    %c0_9 = arith.constant 0 : index
    %c0_10 = arith.constant 0 : index
    %18 = vector.load %arg3[%c0_9, %c0_10] : memref<304x256xf32, #tpu.memory_space<vmem>>, vector<64x256xf32>
    %cst_11 = arith.constant dense<0.000000e+00> : vector<28x256xf32>
    %19 = tpu.matmul %0, %18, %cst_11 {dimension_numbers = #tpu.dot_dimension_numbers<[1], [0], [0], [1], [0, 0, 1, 1], [], []>} : vector<28x64xf32>, vector<64x256xf32>, vector<28x256xf32> -> vector<28x256xf32>
    %c256 = arith.constant 256 : index
    %c0_12 = arith.constant 0 : index
    %20 = vector.load %arg3[%c256, %c0_12] : memref<304x256xf32, #tpu.memory_space<vmem>>, vector<1x256xf32>
    %21 = vector.broadcast %20 : vector<1x256xf32> to vector<28x256xf32>
    %22 = arith.addf %19, %21 : vector<28x256xf32>
    %23 = vector.extract_strided_slice %22 {offsets = [0, 0], sizes = [28, 64], strides = [1, 1]} : vector<28x256xf32> to vector<28x64xf32>
    %24 = vector.extract_strided_slice %22 {offsets = [0, 64], sizes = [28, 64], strides = [1, 1]} : vector<28x256xf32> to vector<28x64xf32>
    %cst_13 = arith.constant dense<0.000000e+00> : vector<3x28xf32>
    %25 = tpu.matmul %17, %23, %cst_13 {dimension_numbers = #tpu.dot_dimension_numbers<[1], [1], [0], [0], [0, 0, 1, 0], [], []>} : vector<3x64xf32>, vector<28x64xf32>, vector<3x28xf32> -> vector<3x28xf32>
    %cst_14 = arith.constant 1.250000e-01 : f32
    %26 = vector.broadcast %cst_14 : f32 to vector<3x28xf32>
    %27 = arith.mulf %25, %26 : vector<3x28xf32>
    %28 = tpu.concatenate %27, %27 in 0 : vector<3x28xf32>, vector<3x28xf32> -> vector<6x28xf32>
    %29 = tpu.iota {dimensions = array<i32: 0>} : vector<6x1xi32>
    %30 = tpu.iota {dimensions = array<i32: 1>} : vector<1x28xi32>
    %c3_i32 = arith.constant 3 : i32
    %31 = vector.broadcast %c3_i32 : i32 to vector<6x1xi32>
    %32 = arith.cmpi slt, %29, %31 : vector<6x1xi32>
    %c16_i32 = arith.constant 16 : i32
    %33 = vector.broadcast %c16_i32 : i32 to vector<1x28xi32>
    %34 = arith.cmpi slt, %30, %33 : vector<1x28xi32>
    %35 = vector.broadcast %32 : vector<6x1xi1> to vector<6x28xi1>
    %36 = vector.broadcast %34 : vector<1x28xi1> to vector<6x28xi1>
    %37 = arith.andi %35, %36 : vector<6x28xi1>
    %c3_i32_15 = arith.constant 3 : i32
    %38 = vector.broadcast %c3_i32_15 : i32 to vector<6x1xi32>
    %39 = arith.cmpi sge, %29, %38 : vector<6x1xi32>
    %c16_i32_16 = arith.constant 16 : i32
    %40 = vector.broadcast %c16_i32_16 : i32 to vector<1x28xi32>
    %41 = arith.cmpi sge, %30, %40 : vector<1x28xi32>
    %42 = vector.broadcast %39 : vector<6x1xi1> to vector<6x28xi1>
    %43 = vector.broadcast %41 : vector<1x28xi1> to vector<6x28xi1>
    %44 = arith.andi %42, %43 : vector<6x28xi1>
    %45 = arith.ori %37, %44 : vector<6x28xi1>
    %cst_17 = arith.constant 0xFF800000 : f32
    %46 = vector.broadcast %cst_17 : f32 to vector<6x28xf32>
    %47 = arith.select %45, %28, %46 : vector<6x28xi1>, vector<6x28xf32>
    %cst_18 = arith.constant dense<0xFF800000> : vector<6xf32>
    %48 = vector.multi_reduction <maximumf>, %47, %cst_18 [1] : vector<6x28xf32> to vector<6xf32>
    %49 = vector.shape_cast %48 : vector<6xf32> to vector<6x1xf32>
    %50 = vector.broadcast %49 : vector<6x1xf32> to vector<6x28xf32>
    %51 = arith.subf %47, %50 : vector<6x28xf32>
    %52 = math.exp %51 : vector<6x28xf32>
    %cst_19 = arith.constant dense<0.000000e+00> : vector<6xf32>
    %53 = vector.multi_reduction <add>, %52, %cst_19 [1] : vector<6x28xf32> to vector<6xf32>
    %54 = vector.shape_cast %53 : vector<6xf32> to vector<6x1xf32>
    %55 = tpu.reciprocal %54 {approx = true} : vector<6x1xf32> -> vector<6x1xf32>
    %56 = vector.broadcast %55 : vector<6x1xf32> to vector<6x28xf32>
    %57 = arith.mulf %52, %56 : vector<6x28xf32>
    %cst_20 = arith.constant dense<0.000000e+00> : vector<6x64xf32>
    %58 = tpu.matmul %57, %24, %cst_20 {dimension_numbers = #tpu.dot_dimension_numbers<[1], [0], [0], [1], [0, 0, 1, 1], [], []>} : vector<6x28xf32>, vector<28x64xf32>, vector<6x64xf32> -> vector<6x64xf32>
    %59 = tpu.concatenate %16, %16 in 0 : vector<3x64xf32>, vector<3x64xf32> -> vector<6x64xf32>
    %c128_21 = arith.constant 128 : index
    %c128_22 = arith.constant 128 : index
    %60 = vector.load %arg3[%c128_21, %c128_22] : memref<304x256xf32, #tpu.memory_space<vmem>>, vector<64x64xf32>
    %cst_23 = arith.constant dense<0.000000e+00> : vector<6x64xf32>
    %61 = tpu.matmul %58, %60, %cst_23 {dimension_numbers = #tpu.dot_dimension_numbers<[1], [0], [0], [1], [0, 0, 1, 1], [], []>} : vector<6x64xf32>, vector<64x64xf32>, vector<6x64xf32> -> vector<6x64xf32>
    %c280 = arith.constant 280 : index
    %c0_24 = arith.constant 0 : index
    %62 = vector.load %arg3[%c280, %c0_24] : memref<304x256xf32, #tpu.memory_space<vmem>>, vector<1x64xf32>
    %63 = vector.broadcast %62 : vector<1x64xf32> to vector<6x64xf32>
    %64 = arith.addf %61, %63 : vector<6x64xf32>
    %65 = arith.addf %64, %59 : vector<6x64xf32>
    %cst_25 = arith.constant dense<0.000000e+00> : vector<6xf32>
    %66 = vector.multi_reduction <add>, %65, %cst_25 [1] : vector<6x64xf32> to vector<6xf32>
    %67 = vector.shape_cast %66 : vector<6xf32> to vector<6x1xf32>
    %cst_26 = arith.constant 6.400000e+01 : f32
    %68 = vector.broadcast %cst_26 : f32 to vector<6x1xf32>
    %69 = arith.divf %67, %68 : vector<6x1xf32>
    %70 = vector.broadcast %69 : vector<6x1xf32> to vector<6x64xf32>
    %71 = arith.subf %65, %70 : vector<6x64xf32>
    %72 = arith.mulf %71, %71 : vector<6x64xf32>
    %cst_27 = arith.constant dense<0.000000e+00> : vector<6xf32>
    %73 = vector.multi_reduction <add>, %72, %cst_27 [1] : vector<6x64xf32> to vector<6xf32>
    %74 = vector.shape_cast %73 : vector<6xf32> to vector<6x1xf32>
    %cst_28 = arith.constant 6.400000e+01 : f32
    %75 = vector.broadcast %cst_28 : f32 to vector<6x1xf32>
    %76 = arith.divf %74, %75 : vector<6x1xf32>
    %77 = vector.broadcast %69 : vector<6x1xf32> to vector<6x64xf32>
    %78 = arith.subf %65, %77 : vector<6x64xf32>
    %cst_29 = arith.constant 9.99999974E-6 : f32
    %79 = vector.broadcast %cst_29 : f32 to vector<6x1xf32>
    %80 = arith.addf %76, %79 : vector<6x1xf32>
    %81 = math.rsqrt %80 : vector<6x1xf32>
    %82 = vector.broadcast %81 : vector<6x1xf32> to vector<6x64xf32>
    %83 = arith.mulf %78, %82 : vector<6x64xf32>
    %c288 = arith.constant 288 : index
    %c0_30 = arith.constant 0 : index
    %84 = vector.load %arg3[%c288, %c0_30] : memref<304x256xf32, #tpu.memory_space<vmem>>, vector<1x64xf32>
    %85 = vector.broadcast %84 : vector<1x64xf32> to vector<6x64xf32>
    %86 = arith.mulf %83, %85 : vector<6x64xf32>
    %c288_31 = arith.constant 288 : index
    %c128_32 = arith.constant 128 : index
    %87 = vector.load %arg3[%c288_31, %c128_32] : memref<304x256xf32, #tpu.memory_space<vmem>>, vector<1x64xf32>
    %88 = vector.broadcast %87 : vector<1x64xf32> to vector<6x64xf32>
    %89 = arith.addf %86, %88 : vector<6x64xf32>
    %c64 = arith.constant 64 : index
    %c0_33 = arith.constant 0 : index
    %90 = vector.load %arg3[%c64, %c0_33] : memref<304x256xf32, #tpu.memory_space<vmem>>, vector<64x192xf32>
    %cst_34 = arith.constant dense<0.000000e+00> : vector<6x192xf32>
    %91 = tpu.matmul %89, %90, %cst_34 {dimension_numbers = #tpu.dot_dimension_numbers<[1], [0], [0], [1], [0, 0, 1, 1], [], []>} : vector<6x64xf32>, vector<64x192xf32>, vector<6x192xf32> -> vector<6x192xf32>
    %c264 = arith.constant 264 : index
    %c0_35 = arith.constant 0 : index
    %92 = vector.load %arg3[%c264, %c0_35] : memref<304x256xf32, #tpu.memory_space<vmem>>, vector<1x192xf32>
    %93 = vector.broadcast %92 : vector<1x192xf32> to vector<6x192xf32>
    %94 = arith.addf %91, %93 : vector<6x192xf32>
    %95 = vector.extract_strided_slice %94 {offsets = [0, 0], sizes = [6, 32], strides = [1, 1]} : vector<6x192xf32> to vector<6x32xf32>
    %96 = math.tanh %95 : vector<6x32xf32>
    %97 = vector.extract_strided_slice %94 {offsets = [0, 32], sizes = [6, 32], strides = [1, 1]} : vector<6x192xf32> to vector<6x32xf32>
    %98 = arith.negf %97 : vector<6x32xf32>
    %99 = math.exp %98 : vector<6x32xf32>
    %cst_36 = arith.constant 1.000000e+00 : f32
    %100 = vector.broadcast %cst_36 : f32 to vector<6x32xf32>
    %101 = arith.addf %100, %99 : vector<6x32xf32>
    %102 = arith.divf %100, %101 : vector<6x32xf32>
    %103 = arith.mulf %96, %102 : vector<6x32xf32>
    %c296 = arith.constant 296 : index
    %c0_37 = arith.constant 0 : index
    %104 = vector.load %arg3[%c296, %c0_37] : memref<304x256xf32, #tpu.memory_space<vmem>>, vector<1x32xf32>
    %105 = vector.broadcast %104 : vector<1x32xf32> to vector<6x32xf32>
    %106 = arith.mulf %103, %105 : vector<6x32xf32>
    %cst_38 = arith.constant dense<0.000000e+00> : vector<6xf32>
    %107 = vector.multi_reduction <add>, %106, %cst_38 [1] : vector<6x32xf32> to vector<6xf32>
    %108 = vector.shape_cast %107 : vector<6xf32> to vector<6x1xf32>
    %c296_39 = arith.constant 296 : index
    %c128_40 = arith.constant 128 : index
    %109 = vector.load %arg3[%c296_39, %c128_40] : memref<304x256xf32, #tpu.memory_space<vmem>>, vector<1x1xf32>
    %110 = vector.broadcast %109 : vector<1x1xf32> to vector<6x1xf32>
    %111 = arith.addf %108, %110 : vector<6x1xf32>
    %c3_i32_41 = arith.constant 3 : i32
    %112 = vector.broadcast %c3_i32_41 : i32 to vector<6x1xi32>
    %113 = arith.cmpi slt, %29, %112 : vector<6x1xi32>
    %cst_42 = arith.constant 0xFF800000 : f32
    %114 = vector.broadcast %cst_42 : f32 to vector<6x1xf32>
    %115 = arith.select %113, %111, %114 : vector<6x1xi1>, vector<6x1xf32>
    %cst_43 = arith.constant dense<0xFF800000> : vector<1xf32>
    %116 = vector.multi_reduction <maximumf>, %115, %cst_43 [0] : vector<6x1xf32> to vector<1xf32>
    %117 = vector.shape_cast %116 : vector<1xf32> to vector<1x1xf32>
    %cst_44 = arith.constant 0xFF800000 : f32
    %118 = vector.broadcast %cst_44 : f32 to vector<6x1xf32>
    %119 = arith.select %113, %118, %111 : vector<6x1xi1>, vector<6x1xf32>
    %cst_45 = arith.constant dense<0xFF800000> : vector<1xf32>
    %120 = vector.multi_reduction <maximumf>, %119, %cst_45 [0] : vector<6x1xf32> to vector<1xf32>
    %121 = vector.shape_cast %120 : vector<1xf32> to vector<1x1xf32>
    %122 = vector.shape_cast %117 : vector<1x1xf32> to vector<1x1xf32>
    %123 = vector.broadcast %122 : vector<1x1xf32> to vector<6x1xf32>
    %124 = vector.shape_cast %121 : vector<1x1xf32> to vector<1x1xf32>
    %125 = vector.broadcast %124 : vector<1x1xf32> to vector<6x1xf32>
    %126 = arith.select %113, %123, %125 : vector<6x1xi1>, vector<6x1xf32>
    %127 = arith.subf %111, %126 : vector<6x1xf32>
    %128 = math.exp %127 : vector<6x1xf32>
    %cst_46 = arith.constant 0.000000e+00 : f32
    %129 = vector.broadcast %cst_46 : f32 to vector<6x1xf32>
    %130 = arith.select %113, %128, %129 : vector<6x1xi1>, vector<6x1xf32>
    %cst_47 = arith.constant dense<0.000000e+00> : vector<1xf32>
    %131 = vector.multi_reduction <add>, %130, %cst_47 [0] : vector<6x1xf32> to vector<1xf32>
    %132 = vector.shape_cast %131 : vector<1xf32> to vector<1x1xf32>
    %cst_48 = arith.constant 0.000000e+00 : f32
    %133 = vector.broadcast %cst_48 : f32 to vector<6x1xf32>
    %134 = arith.select %113, %133, %128 : vector<6x1xi1>, vector<6x1xf32>
    %cst_49 = arith.constant dense<0.000000e+00> : vector<1xf32>
    %135 = vector.multi_reduction <add>, %134, %cst_49 [0] : vector<6x1xf32> to vector<1xf32>
    %136 = vector.shape_cast %135 : vector<1xf32> to vector<1x1xf32>
    %137 = tpu.reciprocal %132 {approx = true} : vector<1x1xf32> -> vector<1x1xf32>
    %138 = tpu.reciprocal %136 {approx = true} : vector<1x1xf32> -> vector<1x1xf32>
    %139 = vector.shape_cast %137 : vector<1x1xf32> to vector<1x1xf32>
    %140 = vector.broadcast %139 : vector<1x1xf32> to vector<6x1xf32>
    %141 = vector.shape_cast %138 : vector<1x1xf32> to vector<1x1xf32>
    %142 = vector.broadcast %141 : vector<1x1xf32> to vector<6x1xf32>
    %143 = arith.select %113, %140, %142 : vector<6x1xi1>, vector<6x1xf32>
    %144 = arith.mulf %128, %143 : vector<6x1xf32>
    %145 = vector.broadcast %144 : vector<6x1xf32> to vector<6x64xf32>
    %146 = arith.mulf %145, %89 : vector<6x64xf32>
    %cst_50 = arith.constant dense<0.000000e+00> : vector<64xf32>
    %147 = vector.multi_reduction <add>, %146, %cst_50 [0] : vector<6x64xf32> to vector<64xf32>
    %148 = vector.shape_cast %147 : vector<64xf32> to vector<1x64xf32>
    %149 = vector.extract_strided_slice %94 {offsets = [0, 64], sizes = [3, 128], strides = [1, 1]} : vector<6x192xf32> to vector<3x128xf32>
    %150 = vector.extract_strided_slice %22 {offsets = [0, 128], sizes = [16, 128], strides = [1, 1]} : vector<28x256xf32> to vector<16x128xf32>
    %151 = tpu.concatenate %149, %150 in 0 : vector<3x128xf32>, vector<16x128xf32> -> vector<19x128xf32>
    %152 = vector.extract_strided_slice %151 {offsets = [0, 0], sizes = [19, 64], strides = [1, 1]} : vector<19x128xf32> to vector<19x64xf32>
    %153 = vector.extract_strided_slice %151 {offsets = [0, 64], sizes = [19, 64], strides = [1, 1]} : vector<19x128xf32> to vector<19x64xf32>
    %cst_51 = arith.constant dense<0.000000e+00> : vector<3x19xf32>
    %154 = tpu.matmul %7, %152, %cst_51 {dimension_numbers = #tpu.dot_dimension_numbers<[1], [1], [0], [0], [0, 0, 1, 0], [], []>} : vector<3x64xf32>, vector<19x64xf32>, vector<3x19xf32> -> vector<3x19xf32>
    %cst_52 = arith.constant 1.250000e-01 : f32
    %155 = vector.broadcast %cst_52 : f32 to vector<3x19xf32>
    %156 = arith.mulf %154, %155 : vector<3x19xf32>
    %157 = tpu.iota {dimensions = array<i32: 1>} : vector<1x19xi32>
    %c3_i32_53 = arith.constant 3 : i32
    %158 = vector.broadcast %c3_i32_53 : i32 to vector<1x19xi32>
    %159 = arith.cmpi slt, %157, %158 : vector<1x19xi32>
    %cst_54 = arith.constant 0.693147182 : f32
    %cst_55 = arith.constant 0.000000e+00 : f32
    %160 = vector.broadcast %cst_54 : f32 to vector<1x19xf32>
    %161 = vector.broadcast %cst_55 : f32 to vector<1x19xf32>
    %162 = arith.select %159, %160, %161 : vector<1x19xi1>, vector<1x19xf32>
    %163 = vector.broadcast %162 : vector<1x19xf32> to vector<3x19xf32>
    %164 = arith.addf %156, %163 : vector<3x19xf32>
    %cst_56 = arith.constant dense<0xFF800000> : vector<3xf32>
    %165 = vector.multi_reduction <maximumf>, %164, %cst_56 [1] : vector<3x19xf32> to vector<3xf32>
    %166 = vector.shape_cast %165 : vector<3xf32> to vector<3x1xf32>
    %167 = vector.broadcast %166 : vector<3x1xf32> to vector<3x19xf32>
    %168 = arith.subf %164, %167 : vector<3x19xf32>
    %169 = math.exp %168 : vector<3x19xf32>
    %cst_57 = arith.constant dense<0.000000e+00> : vector<3xf32>
    %170 = vector.multi_reduction <add>, %169, %cst_57 [1] : vector<3x19xf32> to vector<3xf32>
    %171 = vector.shape_cast %170 : vector<3xf32> to vector<3x1xf32>
    %172 = tpu.reciprocal %171 {approx = true} : vector<3x1xf32> -> vector<3x1xf32>
    %173 = vector.broadcast %172 : vector<3x1xf32> to vector<3x19xf32>
    %174 = arith.mulf %169, %173 : vector<3x19xf32>
    %cst_58 = arith.constant dense<0.000000e+00> : vector<3x64xf32>
    %175 = tpu.matmul %174, %153, %cst_58 {dimension_numbers = #tpu.dot_dimension_numbers<[1], [0], [0], [1], [0, 0, 1, 1], [], []>} : vector<3x19xf32>, vector<19x64xf32>, vector<3x64xf32> -> vector<3x64xf32>
    %c192_59 = arith.constant 192 : index
    %c0_60 = arith.constant 0 : index
    %176 = vector.load %arg3[%c192_59, %c0_60] : memref<304x256xf32, #tpu.memory_space<vmem>>, vector<64x64xf32>
    %cst_61 = arith.constant dense<0.000000e+00> : vector<3x64xf32>
    %177 = tpu.matmul %175, %176, %cst_61 {dimension_numbers = #tpu.dot_dimension_numbers<[1], [0], [0], [1], [0, 0, 1, 1], [], []>} : vector<3x64xf32>, vector<64x64xf32>, vector<3x64xf32> -> vector<3x64xf32>
    %c280_62 = arith.constant 280 : index
    %c128_63 = arith.constant 128 : index
    %178 = vector.load %arg3[%c280_62, %c128_63] : memref<304x256xf32, #tpu.memory_space<vmem>>, vector<1x64xf32>
    %179 = vector.broadcast %178 : vector<1x64xf32> to vector<3x64xf32>
    %180 = arith.addf %177, %179 : vector<3x64xf32>
    %181 = arith.addf %180, %1 : vector<3x64xf32>
    %cst_64 = arith.constant dense<0.000000e+00> : vector<1x3xf32>
    %182 = tpu.matmul %148, %181, %cst_64 {dimension_numbers = #tpu.dot_dimension_numbers<[1], [1], [0], [0], [0, 0, 1, 0], [], []>} : vector<1x64xf32>, vector<3x64xf32>, vector<1x3xf32> -> vector<1x3xf32>
    %cst_65 = arith.constant dense<0xFF800000> : vector<1xf32>
    %183 = vector.multi_reduction <maximumf>, %182, %cst_65 [1] : vector<1x3xf32> to vector<1xf32>
    %184 = vector.shape_cast %183 : vector<1xf32> to vector<1x1xf32>
    %185 = vector.broadcast %184 : vector<1x1xf32> to vector<1x3xf32>
    %186 = arith.subf %182, %185 : vector<1x3xf32>
    %187 = math.exp %186 : vector<1x3xf32>
    %cst_66 = arith.constant dense<0.000000e+00> : vector<1xf32>
    %188 = vector.multi_reduction <add>, %187, %cst_66 [1] : vector<1x3xf32> to vector<1xf32>
    %189 = vector.shape_cast %188 : vector<1xf32> to vector<1x1xf32>
    %190 = vector.broadcast %189 : vector<1x1xf32> to vector<1x3xf32>
    %191 = arith.divf %187, %190 : vector<1x3xf32>
    %192 = vector.broadcast %184 : vector<1x1xf32> to vector<1x3xf32>
    %193 = arith.subf %182, %192 : vector<1x3xf32>
    %194 = math.log %189 : vector<1x1xf32>
    %195 = vector.broadcast %194 : vector<1x1xf32> to vector<1x3xf32>
    %196 = arith.subf %193, %195 : vector<1x3xf32>
    %c0_67 = arith.constant 0 : index
    %197 = memref.load %arg1[%c0_67] : memref<1xi32, #tpu.memory_space<smem>>
    %198 = tpu.iota {dimensions = array<i32: 1>} : vector<1x3xi32>
    %199 = vector.broadcast %197 : i32 to vector<1x3xi32>
    %200 = arith.cmpi eq, %198, %199 : vector<1x3xi32>
    %cst_68 = arith.constant 0.000000e+00 : f32
    %201 = vector.broadcast %cst_68 : f32 to vector<1x3xf32>
    %202 = arith.select %200, %196, %201 : vector<1x3xi1>, vector<1x3xf32>
    %cst_69 = arith.constant dense<0.000000e+00> : vector<1xf32>
    %203 = vector.multi_reduction <add>, %202, %cst_69 [1] : vector<1x3xf32> to vector<1xf32>
    %204 = vector.shape_cast %203 : vector<1xf32> to vector<1x1xf32>
    %cst_70 = arith.constant 0.000000e+00 : f32
    %205 = vector.broadcast %cst_70 : f32 to vector<1x1xf32>
    %206 = arith.subf %205, %204 : vector<1x1xf32>
    %cst_71 = arith.constant 0.000000e+00 : f32
    %207 = vector.broadcast %cst_71 : f32 to vector<1x124xf32>
    %208 = tpu.concatenate %191, %206, %207 in 1 : vector<1x3xf32>, vector<1x1xf32>, vector<1x124xf32> -> vector<1x128xf32>
    %c0_72 = arith.constant 0 : index
    %c0_73 = arith.constant 0 : index
    %209 = vector.load %arg4[%c0_72, %c0_73] : memref<1x128xf32, #tpu.memory_space<vmem>>, vector<1x128xf32>
    tpu.vector_store %arg4[%c0_72, %c0_73], %208 {strides = array<i32>} : memref<1x128xf32, #tpu.memory_space<vmem>>, vector<1x128xf32>,
    return
  }
  func.func @transform_0(%arg0: i32, %arg1: memref<1xi32, #tpu.memory_space<smem>>) -> (i32, i32) {
    %c0_i32 = arith.constant 0 : i32
    %c0_i32_0 = arith.constant 0 : i32
    %c0_i32_1 = arith.constant 0 : i32
    return %c0_i32, %c0_i32_0 : i32, i32
  }
  func.func @transform_1(%arg0: i32, %arg1: memref<1xi32, #tpu.memory_space<smem>>) -> (i32, i32) {
    %c0_i32 = arith.constant 0 : i32
    %c0_i32_0 = arith.constant 0 : i32
    %c0_i32_1 = arith.constant 0 : i32
    return %c0_i32, %c0_i32_0 : i32, i32
  }
  func.func @transform_2(%arg0: i32, %arg1: memref<1xi32, #tpu.memory_space<smem>>) -> (i32, i32) {
    %c0_i32 = arith.constant 0 : i32
    %c0_i32_0 = arith.constant 0 : i32
    %c0_i32_1 = arith.constant 0 : i32
    return %c0_i32, %c0_i32_0 : i32, i32
  }
}

</mosaic_0001>

<llo_original>
// kernel: tpu_custom_call.1
$region0: #{tpu_custom_call.1}
  #allocation0 [shape = 'u32[]', space=smem, size = 0x4, offset = 0x4, fixed_abs, tag = 'smem constant byte address 0x4 - core index']
  #allocation1 [shape = 'u32[144,128]{1,0:T(1,128)}', space=vmem, size = 0x12000, scoped, tag = 'internal scratch']
  #allocation2 [shape = 's32[1]{0}', space=sflag, size = 0x4, scoped, tag = 'scoped memory for tpu_custom_call.1']
  #allocation3 [shape = 's32[1]{0:T(128)S(6)}', space=smem, size = 0x200, scoped, tag = 'prefetched SMEM operand 0']
  %s0 = inlined_call_operand.<no memory space> [shape: s32[1], index: 0, kind: input, shape index: {}]
  %s1 = inlined_call_operand.hbm [shape: f32[40,64], index: 1, kind: input, shape index: {}]
  %s2 = inlined_call_operand.hbm [shape: f32[304,256], index: 2, kind: input, shape index: {}]
  %s3 = inlined_call_operand.hbm [shape: f32[1,128], index: 3, kind: output, shape index: {}]
  %s4 = sld [smem:[#allocation0]]
  $region26: #{tpu_custom_call.1} parent=0
    _
  %s6 = ssub.s32 1, %s4
  %s7 = scalar_select 0, %s6, %s4
  %8 = sst [smem:[#allocation3]] %s0
  $region1: #{tpu_custom_call.1} parent=0
    #allocation4 [shape = 'u8[20480]{0}', space=vmem, size = 0x5000, scoped, tag = 'input window, operand 1, single buffered']
    #allocation5 [shape = 's32[1]{0}', space=sflag, size = 0x4, scoped, tag = 'scoped memory for tpu_custom_call.1']
    #allocation6 [shape = 's32[1]{0}', space=sflag, size = 0x4, scoped, tag = 'scoped memory for tpu_custom_call.1']
    #allocation7 [shape = 'u8[311296]{0}', space=vmem, size = 0x4c000, scoped, tag = 'input window, operand 2, single buffered']
    #allocation8 [shape = 's32[1]{0}', space=sflag, size = 0x4, scoped, tag = 'scoped memory for tpu_custom_call.1']
    #allocation9 [shape = 'u8[512]{0}', space=vmem, size = 0x400, scoped, tag = 'output window, operand 0, single buffered']
    %9 = vsyncpa [#allocation5], 0
    %10 = vsyncpa [#allocation8], 0
    %11 = vsyncpa [#allocation6], 0
    // Predicated region
    $region2: #{tpu_custom_call.1} parent=1 // pred_check
      _
    $region3: #{tpu_custom_call.1} parent=1 // pred_check_branch
      %13 = sbr.rel (0) target = $region5
    $region4: #{tpu_custom_call.1} parent=1 // pred_region
      %s15 = ssub.s32 640, 640
      %16 = vsyncadd [#allocation5], %s15
      %s17 = sshll.u32 [#allocation4], 4
      %s18 = int_to_ptr.vmem [resolvable:$true] %s17
      %23 = dma.hbm_to_vmem [thread:$0]  %s1, 640, %s18, [#allocation5], 128, 128, 8
    $region5: #{tpu_custom_call.1} parent=1 // pred_fallthru
      _
    // Predicated region
    $region6: #{tpu_custom_call.1} parent=1 // pred_check
      _
    $region7: #{tpu_custom_call.1} parent=1 // pred_check_branch
      %25 = sbr.rel (0) target = $region9
    $region8: #{tpu_custom_call.1} parent=1 // pred_region
      %s27 = ssub.s32 9728, 9728
      %28 = vsyncadd [#allocation8], %s27
      %s29 = sshll.u32 [#allocation7], 4
      %s30 = int_to_ptr.vmem [resolvable:$true] %s29
      %35 = dma.hbm_to_vmem [thread:$0]  %s2, 9728, %s30, [#allocation8], 256, 256, 16
    $region9: #{tpu_custom_call.1} parent=1 // pred_fallthru
      _
    // Predicated region
    $region10: #{tpu_custom_call.1} parent=1 // pred_check
      _
    $region11: #{tpu_custom_call.1} parent=1 // pred_check_branch
      %37 = sbr.rel (0) target = $region13
    $region12: #{tpu_custom_call.1} parent=1 // pred_region
      %38 = dma.done [#allocation5], 640
    $region13: #{tpu_custom_call.1} parent=1 // pred_fallthru
      _
    // Predicated region
    $region14: #{tpu_custom_call.1} parent=1 // pred_check
      _
    $region15: #{tpu_custom_call.1} parent=1 // pred_check_branch
      %40 = sbr.rel (0) target = $region17
    $region16: #{tpu_custom_call.1} parent=1 // pred_region
      %41 = dma.done [#allocation8], 9728
    $region17: #{tpu_custom_call.1} parent=1 // pred_fallthru
      _
    %v42 = vld [vmem:[#allocation4] sm:$0xff]
    %v43 = vld [vmem:[#allocation4 + $0x8] sm:$0xff]
    %v44 = vld [vmem:[#allocation4 + $0x10] sm:$0xff]
    %v45 = vld [vmem:[#allocation4 + $0x18] sm:$0xf]
    %v46 = vld [vmem:[#allocation4 + $0x20] sm:$0x7]
    %v47 = vld [vmem:[#allocation7 + $0x100] sm:$0xff]
    %v48 = vld [vmem:[#allocation7 + $0x110] sm:$0xff]
    %v49 = vld [vmem:[#allocation7 + $0x120] sm:$0xff]
    %v50 = vld [vmem:[#allocation7 + $0x130] sm:$0xff]
    %v51 = vld [vmem:[#allocation7 + $0x140] sm:$0xff]
    %v52 = vld [vmem:[#allocation7 + $0x150] sm:$0xff]
    %v53 = vld [vmem:[#allocation7 + $0x160] sm:$0xff]
    %v54 = vld [vmem:[#allocation7 + $0x170] sm:$0xff]
    %v55 = vld [vmem:[#allocation7 + $0x220] ss:$0 sm:$0xff]
    %vm56 = vcmask 523264
    %v58 = vsel %vm56, %v46, 0
    %60 = vmatprep.subr.mxu0 0.0
    %61 = vmatpush1.msra.mxu0 0.0
    %62 = vmatprep.subr.mxu0 0.0
    %63 = vmatpush1.msra.mxu0 0.0
    %64 = vmatprep.subr.mxu0 0.0
    %65 = vmatpush1.msra.mxu0 0.0
    %66 = vmatprep.subr.mxu0 0.0
    %67 = vmatpush1.msra.mxu0 0.0
    %68 = vmatprep.subr.mxu0 0.0
    %69 = vmatpush1.msra.mxu0 0.0
    %70 = vmatprep.subr.mxu0 0.0
    %71 = vmatpush1.msra.mxu0 0.0
    %72 = vmatprep.subr.mxu0 0.0
    %73 = vmatpush1.msra.mxu0 0.0
    %74 = vmatprep.subr.mxu0 0.0
    %75 = vmatpush1.msra.mxu0 0.0
    %76 = vmatprep.subr.mxu0 0.0
    %77 = vmatpush1.msra.mxu0 %v54
    %78 = vmatprep.subr.mxu0 0.0
    %79 = vmatpush1.msra.mxu0 %v53
    %80 = vmatprep.subr.mxu0 0.0
    %81 = vmatpush1.msra.mxu0 %v52
    %82 = vmatprep.subr.mxu0 0.0
    %83 = vmatpush1.msra.mxu0 %v51
    %84 = vmatprep.subr.mxu0 0.0
    %85 = vmatpush1.msra.mxu0 %v50
    %86 = vmatprep.subr.mxu0 0.0
    %87 = vmatpush1.msra.mxu0 %v49
    %88 = vmatprep.subr.mxu0 0.0
    %89 = vmatpush1.msra.mxu0 %v48
    %90 = vmatprep.subr.mxu0 0.0
    %91 = vmatpush1.msra.mxu0 %v47
    %92 = vmatprep.subr.mxu0 0.0
    %93 = vmatpush2.msra.mxu0 0.0
    %94 = vmatprep.subr.mxu0 0.0
    %95 = vmatpush2.msra.mxu0 0.0
    %96 = vmatprep.subr.mxu0 0.0
    %97 = vmatpush2.msra.mxu0 0.0
    %98 = vmatprep.subr.mxu0 0.0
    %99 = vmatpush2.msra.mxu0 0.0
    %100 = vmatprep.subr.mxu0 0.0
    %101 = vmatpush2.msra.mxu0 0.0
    %102 = vmatprep.subr.mxu0 0.0
    %103 = vmatpush2.msra.mxu0 0.0
    %104 = vmatprep.subr.mxu0 0.0
    %105 = vmatpush2.msra.mxu0 0.0
    %106 = vmatprep.subr.mxu0 0.0
    %107 = vmatpush2.msra.mxu0 0.0
    %108 = vmatprep.subr.mxu0 0.0
    %109 = vmatpush2.msra.mxu0 0.0
    %110 = vmatprep.subr.mxu0 0.0
    %111 = vmatpush2.msra.mxu0 0.0
    %112 = vmatprep.subr.mxu0 0.0
    %113 = vmatpush2.msra.mxu0 0.0
    %114 = vmatprep.subr.mxu0 0.0
    %115 = vmatpush2.msra.mxu0 0.0
    %116 = vmatprep.subr.mxu0 0.0
    %117 = vmatpush2.msra.mxu0 0.0
    %118 = vmatprep.subr.mxu0 0.0
    %119 = vmatpush2.msra.mxu0 0.0
    %120 = vmatprep.subr.mxu0 0.0
    %121 = vmatpush2.msra.mxu0 0.0
    %122 = vmatprep.subr.mxu0 0.0
    %123 = vmatpush2.msra.mxu0 0.0
    %124 = vmatprep.mubr.f32.mxu0 0.0
    %125 = vmatmul.mubr.f32.gmra.mxu0 %v58
    %v126 = vpop.f32.mrf.mxu0
    %v127 = vadd.f32 %v55, %v126
    %v128 = vpop.f32.mrf.mxu0
    %129 = vdwg.mxu0
    %v130 = vmax.f32 %v127, 0.0
    %v131 = vld [vmem:[#allocation7 + $0x188] sm:$0xff]
    %v132 = vld [vmem:[#allocation7 + $0x198] sm:$0xff]
    %v133 = vld [vmem:[#allocation7 + $0x1a8] sm:$0xff]
    %v134 = vld [vmem:[#allocation7 + $0x1b8] sm:$0xff]
    %v135 = vld [vmem:[#allocation7 + $0x228] ss:$0 sm:$0xff]
    %137 = vrot.lane.b32.xlu0 %v130, 64
    %v138 = vpop.permute.xlu0 %137
    %vm139 = vcmask 261120
    %v140 = vsel %vm139, %v138, 0
    %142 = vmatprep.subr.mxu0 0.0
    %143 = vmatpush1.msra.mxu0 0.0
    %144 = vmatprep.subr.mxu0 0.0
    %145 = vmatpush1.msra.mxu0 0.0
    %146 = vmatprep.subr.mxu0 0.0
    %147 = vmatpush1.msra.mxu0 0.0
    %148 = vmatprep.subr.mxu0 0.0
    %149 = vmatpush1.msra.mxu0 0.0
    %150 = vmatprep.subr.mxu0 0.0
    %151 = vmatpush1.msra.mxu0 0.0
    %152 = vmatprep.subr.mxu0 0.0
    %153 = vmatpush1.msra.mxu0 0.0
    %154 = vmatprep.subr.mxu0 0.0
    %155 = vmatpush1.msra.mxu0 0.0
    %156 = vmatprep.subr.mxu0 0.0
    %157 = vmatpush1.msra.mxu0 0.0
    %158 = vmatprep.subr.mxu0 0.0
    %159 = vmatpush1.msra.mxu0 0.0
    %160 = vmatprep.subr.mxu0 0.0
    %161 = vmatpush1.msra.mxu0 0.0
    %162 = vmatprep.subr.mxu0 0.0
    %163 = vmatpush1.msra.mxu0 0.0
    %164 = vmatprep.subr.mxu0 0.0
    %165 = vmatpush1.msra.mxu0 0.0
    %166 = vmatprep.subr.mxu0 0.0
    %167 = vmatpush1.msra.mxu0 %v134
    %168 = vmatprep.subr.mxu0 0.0
    %169 = vmatpush1.msra.mxu0 %v133
    %170 = vmatprep.subr.mxu0 0.0
    %171 = vmatpush1.msra.mxu0 %v132
    %172 = vmatprep.subr.mxu0 0.0
    %173 = vmatpush1.msra.mxu0 %v131
    %174 = vmatprep.subr.mxu0 0.0
    %175 = vmatpush2.msra.mxu0 0.0
    %176 = vmatprep.subr.mxu0 0.0
    %177 = vmatpush2.msra.mxu0 0.0
    %178 = vmatprep.subr.mxu0 0.0
    %179 = vmatpush2.msra.mxu0 0.0
    %180 = vmatprep.subr.mxu0 0.0
    %181 = vmatpush2.msra.mxu0 0.0
    %182 = vmatprep.subr.mxu0 0.0
    %183 = vmatpush2.msra.mxu0 0.0
    %184 = vmatprep.subr.mxu0 0.0
    %185 = vmatpush2.msra.mxu0 0.0
    %186 = vmatprep.subr.mxu0 0.0
    %187 = vmatpush2.msra.mxu0 0.0
    %188 = vmatprep.subr.mxu0 0.0
    %189 = vmatpush2.msra.mxu0 0.0
    %190 = vmatprep.subr.mxu0 0.0
    %191 = vmatpush2.msra.mxu0 0.0
    %192 = vmatprep.subr.mxu0 0.0
    %193 = vmatpush2.msra.mxu0 0.0
    %194 = vmatprep.subr.mxu0 0.0
    %195 = vmatpush2.msra.mxu0 0.0
    %196 = vmatprep.subr.mxu0 0.0
    %197 = vmatpush2.msra.mxu0 0.0
    %198 = vmatprep.subr.mxu0 0.0
    %199 = vmatpush2.msra.mxu0 0.0
    %200 = vmatprep.subr.mxu0 0.0
    %201 = vmatpush2.msra.mxu0 0.0
    %202 = vmatprep.subr.mxu0 0.0
    %203 = vmatpush2.msra.mxu0 0.0
    %204 = vmatprep.subr.mxu0 0.0
    %205 = vmatpush2.msra.mxu0 0.0
    %206 = vmatprep.mubr.f32.mxu0 0.0
    %207 = vmatmul.mubr.f32.gmra.mxu0 %v140
    %v208 = vpop.f32.mrf.mxu0
    %v209 = vadd.f32 %v135, %v208
    %v210 = vpop.f32.mrf.mxu0
    %211 = vdwg.mxu0
    %v212 = vld [vmem:[#allocation7] sm:$0xff]
    %v213 = vld [vmem:[#allocation7 + $0x8] sm:$0xff]
    %v214 = vld [vmem:[#allocation7 + $0x10] sm:$0xff]
    %v215 = vld [vmem:[#allocation7 + $0x18] sm:$0xff]
    %v216 = vld [vmem:[#allocation7 + $0x20] sm:$0xff]
    %v217 = vld [vmem:[#allocation7 + $0x28] sm:$0xff]
    %v218 = vld [vmem:[#allocation7 + $0x30] sm:$0xff]
    %v219 = vld [vmem:[#allocation7 + $0x38] sm:$0xff]
    %v220 = vld [vmem:[#allocation7 + $0x40] sm:$0xff]
    %v221 = vld [vmem:[#allocation7 + $0x48] sm:$0xff]
    %v222 = vld [vmem:[#allocation7 + $0x50] sm:$0xff]
    %v223 = vld [vmem:[#allocation7 + $0x58] sm:$0xff]
    %v224 = vld [vmem:[#allocation7 + $0x60] sm:$0xff]
    %v225 = vld [vmem:[#allocation7 + $0x68] sm:$0xff]
    %v226 = vld [vmem:[#allocation7 + $0x70] sm:$0xff]
    %v227 = vld [vmem:[#allocation7 + $0x78] sm:$0xff]
    %s228 = scalar_lea.vmem [#allocation7], 512
    %v229 = vld [vmem:[%s228] ss:$8 sm:$0x3]
    %v231 = vlaneseq
    %v232 = vshrl.u32 %v231, 7
    %v233 = vsub.s32 0, %v232
    %v234 = vrot.slane %v229, %v233
    %v235 = vlaneseq
    %v236 = vshrl.u32 %v235, 7
    %v237 = vsub.s32 1, %v236
    %v238 = vrot.slane %v229, %v237
    %v242 = vsel %vm56, %v42, 0
    %v245 = vsel %vm56, %v43, 0
    %v248 = vsel %vm56, %v44, 0
    %v251 = vsel %vm56, %v45, 0
    %253 = vmatprep.subr.mxu0 0.0
    %254 = vmatpush1.msra.mxu0 0.0
    %255 = vmatprep.subr.mxu0 0.0
    %256 = vmatpush1.msra.mxu0 0.0
    %257 = vmatprep.subr.mxu0 0.0
    %258 = vmatpush1.msra.mxu0 0.0
    %259 = vmatprep.subr.mxu0 0.0
    %260 = vmatpush1.msra.mxu0 0.0
    %261 = vmatprep.subr.mxu0 0.0
    %262 = vmatpush1.msra.mxu0 0.0
    %263 = vmatprep.subr.mxu0 0.0
    %264 = vmatpush1.msra.mxu0 0.0
    %265 = vmatprep.subr.mxu0 0.0
    %266 = vmatpush1.msra.mxu0 0.0
    %267 = vmatprep.subr.mxu0 0.0
    %268 = vmatpush1.msra.mxu0 0.0
    %269 = vmatprep.subr.mxu0 %v227
    %270 = vmatpush1.msra.mxu0 %v226
    %271 = vmatprep.subr.mxu0 %v225
    %272 = vmatpush1.msra.mxu0 %v224
    %273 = vmatprep.subr.mxu0 %v223
    %274 = vmatpush1.msra.mxu0 %v222
    %275 = vmatprep.subr.mxu0 %v221
    %276 = vmatpush1.msra.mxu0 %v220
    %277 = vmatprep.subr.mxu0 %v219
    %278 = vmatpush1.msra.mxu0 %v218
    %279 = vmatprep.subr.mxu0 %v217
    %280 = vmatpush1.msra.mxu0 %v216
    %281 = vmatprep.subr.mxu0 %v215
    %282 = vmatpush1.msra.mxu0 %v214
    %283 = vmatprep.subr.mxu0 %v213
    %284 = vmatpush1.msra.mxu0 %v212
    %285 = vmatprep.subr.mxu0 0.0
    %286 = vmatpush2.msra.mxu0 0.0
    %287 = vmatprep.subr.mxu0 0.0
    %288 = vmatpush2.msra.mxu0 0.0
    %289 = vmatprep.subr.mxu0 0.0
    %290 = vmatpush2.msra.mxu0 0.0
    %291 = vmatprep.subr.mxu0 0.0
    %292 = vmatpush2.msra.mxu0 0.0
    %293 = vmatprep.subr.mxu0 0.0
    %294 = vmatpush2.msra.mxu0 0.0
    %295 = vmatprep.subr.mxu0 0.0
    %296 = vmatpush2.msra.mxu0 0.0
    %297 = vmatprep.subr.mxu0 0.0
    %298 = vmatpush2.msra.mxu0 0.0
    %299 = vmatprep.subr.mxu0 0.0
    %300 = vmatpush2.msra.mxu0 0.0
    %301 = vmatprep.subr.mxu0 0.0
    %302 = vmatpush2.msra.mxu0 0.0
    %303 = vmatprep.subr.mxu0 0.0
    %304 = vmatpush2.msra.mxu0 0.0
    %305 = vmatprep.subr.mxu0 0.0
    %306 = vmatpush2.msra.mxu0 0.0
    %307 = vmatprep.subr.mxu0 0.0
    %308 = vmatpush2.msra.mxu0 0.0
    %309 = vmatprep.subr.mxu0 0.0
    %310 = vmatpush2.msra.mxu0 0.0
    %311 = vmatprep.subr.mxu0 0.0
    %312 = vmatpush2.msra.mxu0 0.0
    %313 = vmatprep.subr.mxu0 0.0
    %314 = vmatpush2.msra.mxu0 0.0
    %315 = vmatprep.subr.mxu0 0.0
    %316 = vmatpush2.msra.mxu0 0.0
    %317 = vmatprep.mubr.f32.mxu0 0.0
    %318 = vmatmul.mubr.f32.gmra.mxu0 %v242
    %v319 = vpop.f32.mrf.mxu0
    %v320 = vadd.f32 %v234, %v319
    %v321 = vpop.f32.mrf.mxu0
    %v322 = vadd.f32 %v238, %v321
    %323 = vmatprep.mubr.f32.mxu0 0.0
    %324 = vmatmul.mubr.f32.gmra.mxu0 %v245
    %v325 = vpop.f32.mrf.mxu0
    %v326 = vadd.f32 %v234, %v325
    %v327 = vpop.f32.mrf.mxu0
    %v328 = vadd.f32 %v238, %v327
    %329 = vmatprep.mubr.f32.mxu0 0.0
    %330 = vmatmul.mubr.f32.gmra.mxu0 %v248
    %v331 = vpop.f32.mrf.mxu0
    %v332 = vadd.f32 %v234, %v331
    %v333 = vpop.f32.mrf.mxu0
    %334 = vmatprep.mubr.f32.mxu0 0.0
    %335 = vmatmul.mubr.f32.gmra.mxu0 %v251
    %v336 = vpop.f32.mrf.mxu0
    %v337 = vadd.f32 %v234, %v336
    %v338 = vpop.f32.mrf.mxu0
    %339 = vdwg.mxu0
    %341 = vrot.lane.b32.xlu0 %v209, 64
    %v342 = vpop.permute.xlu0 %341
    %v343 = vsel %vm56, %v342, 0
    %v346 = vsel %vm56, %v320, 0
    %v349 = vsel %vm56, %v326, 0
    %v352 = vsel %vm56, %v332, 0
    %v355 = vsel %vm56, %v337, 0
    %357 = vmatprep.subr.mxu0 0.0
    %358 = vmatpush1.xpose.msra.mxu0 0.0
    %359 = vmatprep.subr.mxu0 0.0
    %360 = vmatpush1.xpose.msra.mxu0 0.0
    %361 = vmatprep.subr.mxu0 0.0
    %362 = vmatpush1.xpose.msra.mxu0 0.0
    %363 = vmatprep.subr.mxu0 0.0
    %364 = vmatpush1.xpose.msra.mxu0 0.0
    %365 = vmatprep.subr.mxu0 0.0
    %366 = vmatpush1.xpose.msra.mxu0 0.0
    %367 = vmatprep.subr.mxu0 0.0
    %368 = vmatpush1.xpose.msra.mxu0 0.0
    %369 = vmatprep.subr.mxu0 0.0
    %370 = vmatpush1.xpose.msra.mxu0 0.0
    %371 = vmatprep.subr.mxu0 0.0
    %372 = vmatpush1.xpose.msra.mxu0 0.0
    %373 = vmatprep.subr.mxu0 0.0
    %374 = vmatpush1.xpose.msra.mxu0 0.0
    %375 = vmatprep.subr.mxu0 0.0
    %376 = vmatpush1.xpose.msra.mxu0 0.0
    %377 = vmatprep.subr.mxu0 0.0
    %378 = vmatpush1.xpose.msra.mxu0 0.0
    %379 = vmatprep.subr.mxu0 0.0
    %380 = vmatpush1.xpose.msra.mxu0 0.0
    %381 = vmatprep.subr.mxu0 0.0
    %382 = vmatpush1.xpose.msra.mxu0 %v355
    %383 = vmatprep.subr.mxu0 0.0
    %384 = vmatpush1.xpose.msra.mxu0 %v352
    %385 = vmatprep.subr.mxu0 0.0
    %386 = vmatpush1.xpose.msra.mxu0 %v349
    %387 = vmatprep.subr.mxu0 0.0
    %388 = vmatpush1.xpose.msra.mxu0 %v346
    %389 = vmatprep.subr.mxu0 0.0
    %390 = vmatpush2.xpose.msra.mxu0 0.0
    %391 = vmatprep.subr.mxu0 0.0
    %392 = vmatpush2.xpose.msra.mxu0 0.0
    %393 = vmatprep.subr.mxu0 0.0
    %394 = vmatpush2.xpose.msra.mxu0 0.0
    %395 = vmatprep.subr.mxu0 0.0
    %396 = vmatpush2.xpose.msra.mxu0 0.0
    %397 = vmatprep.subr.mxu0 0.0
    %398 = vmatpush2.xpose.msra.mxu0 0.0
    %399 = vmatprep.subr.mxu0 0.0
    %400 = vmatpush2.xpose.msra.mxu0 0.0
    %401 = vmatprep.subr.mxu0 0.0
    %402 = vmatpush2.xpose.msra.mxu0 0.0
    %403 = vmatprep.subr.mxu0 0.0
    %404 = vmatpush2.xpose.msra.mxu0 0.0
    %405 = vmatprep.subr.mxu0 0.0
    %406 = vmatpush2.xpose.msra.mxu0 0.0
    %407 = vmatprep.subr.mxu0 0.0
    %408 = vmatpush2.xpose.msra.mxu0 0.0
    %409 = vmatprep.subr.mxu0 0.0
    %410 = vmatpush2.xpose.msra.mxu0 0.0
    %411 = vmatprep.subr.mxu0 0.0
    %412 = vmatpush2.xpose.msra.mxu0 0.0
    %413 = vmatprep.subr.mxu0 0.0
    %414 = vmatpush2.xpose.msra.mxu0 0.0
    %415 = vmatprep.subr.mxu0 0.0
    %416 = vmatpush2.xpose.msra.mxu0 0.0
    %417 = vmatprep.subr.mxu0 0.0
    %418 = vmatpush2.xpose.msra.mxu0 0.0
    %419 = vmatprep.subr.mxu0 0.0
    %420 = vmatpush2.xpose.msra.mxu0 0.0
    %421 = vmatprep.mubr.f32.mxu0 0.0
    %422 = vmatmul.mubr.f32.gmra.mxu0 %v343
    %v423 = vpop.f32.mrf.mxu0
    %v424 = vadd.f32 0.0, %v423
    %v425 = vpop.f32.mrf.mxu0
    %426 = vdwg.mxu0
    %v427 = vmul.f32 %v424, 0.125
    %v429 = vrot.slane %v427, 5
    %vm431 = vcmask 1042432
    %v432 = vsel %vm431, %v427, %v429
    %v433 = vlaneseq
    %v434 = vshrl.u32 %v433, 7
    %v435 = vlaneseq
    %v436 = vand.u32 %v435, 127
    %vm437 = vcmp.lt.s32.totalorder %v434, 3
    %vm438 = vcmp.lt.s32.totalorder %v436, 16
    %v439 = vsel %vm437, 1, 0
    %vm440 = vcmp.eq.s32.totalorder %v439, 1
    %v441 = vsel %vm438, 1, 0
    %vm442 = vcmp.eq.s32.totalorder %v441, 1
    %vm443 = vmand %vm440, %vm442
    %vm444 = vcmp.ge.s32.totalorder %v434, 3
    %vm445 = vcmp.ge.s32.totalorder %v436, 16
    %v446 = vsel %vm444, 1, 0
    %vm447 = vcmp.eq.s32.totalorder %v446, 1
    %v448 = vsel %vm445, 1, 0
    %vm449 = vcmp.eq.s32.totalorder %v448, 1
    %vm450 = vmand %vm447, %vm449
    %vm451 = vmor %vm443, %vm450
    %v452 = vsel %vm451, %v432, -inf
    %vm453 = vcmask 226304
    %v454 = vsel %vm453, %v452, -inf
    %455 = vmax.xlane.f32.xlu0 %v454
    %v456 = vpop.xlane.xlu0 %455
    %v457 = vsub.f32 %v452, %v456
    %v458 = vmul.f32 %v457, 1.442695
    %v459 = vpow.pop %v458
    %v460 = vsel %vm453, %v459, 0.0
    %461 = vadd.xlane.f32.xlu0 %v460
    %v462 = vpop.xlane.xlu0 %461
    %v463 = vrcp.pop %v462
    %v464 = vmul.f32 %v459, %v463
    %465 = vrot.lane.b32.xlu0 %v320, 64
    %v466 = vpop.permute.xlu0 %465
    %467 = vrot.lane.b32.xlu0 %v326, 64
    %v468 = vpop.permute.xlu0 %467
    %469 = vrot.lane.b32.xlu0 %v332, 64
    %v470 = vpop.permute.xlu0 %469
    %471 = vrot.lane.b32.xlu0 %v337, 64
    %v472 = vpop.permute.xlu0 %471
    %vm476 = vcmask 228352
    %v478 = vsel %vm476, %v464, 0
    %vm480 = vcmask 1043456
    %v481 = vsel %vm480, %v472, 0
    %483 = vmatprep.subr.mxu0 0.0
    %484 = vmatpush1.msra.mxu0 0.0
    %485 = vmatprep.subr.mxu0 0.0
    %486 = vmatpush1.msra.mxu0 0.0
    %487 = vmatprep.subr.mxu0 0.0
    %488 = vmatpush1.msra.mxu0 0.0
    %489 = vmatprep.subr.mxu0 0.0
    %490 = vmatpush1.msra.mxu0 0.0
    %491 = vmatprep.subr.mxu0 0.0
    %492 = vmatpush1.msra.mxu0 0.0
    %493 = vmatprep.subr.mxu0 0.0
    %494 = vmatpush1.msra.mxu0 0.0
    %495 = vmatprep.subr.mxu0 0.0
    %496 = vmatpush1.msra.mxu0 0.0
    %497 = vmatprep.subr.mxu0 0.0
    %498 = vmatpush1.msra.mxu0 0.0
    %499 = vmatprep.subr.mxu0 0.0
    %500 = vmatpush1.msra.mxu0 0.0
    %501 = vmatprep.subr.mxu0 0.0
    %502 = vmatpush1.msra.mxu0 0.0
    %503 = vmatprep.subr.mxu0 0.0
    %504 = vmatpush1.msra.mxu0 0.0
    %505 = vmatprep.subr.mxu0 0.0
    %506 = vmatpush1.msra.mxu0 0.0
    %507 = vmatprep.subr.mxu0 0.0
    %508 = vmatpush1.msra.mxu0 %v481
    %509 = vmatprep.subr.mxu0 0.0
    %510 = vmatpush1.msra.mxu0 %v470
    %511 = vmatprep.subr.mxu0 0.0
    %512 = vmatpush1.msra.mxu0 %v468
    %513 = vmatprep.subr.mxu0 0.0
    %514 = vmatpush1.msra.mxu0 %v466
    %515 = vmatprep.subr.mxu0 0.0
    %516 = vmatpush2.msra.mxu0 0.0
    %517 = vmatprep.subr.mxu0 0.0
    %518 = vmatpush2.msra.mxu0 0.0
    %519 = vmatprep.subr.mxu0 0.0
    %520 = vmatpush2.msra.mxu0 0.0
    %521 = vmatprep.subr.mxu0 0.0
    %522 = vmatpush2.msra.mxu0 0.0
    %523 = vmatprep.subr.mxu0 0.0
    %524 = vmatpush2.msra.mxu0 0.0
    %525 = vmatprep.subr.mxu0 0.0
    %526 = vmatpush2.msra.mxu0 0.0
    %527 = vmatprep.subr.mxu0 0.0
    %528 = vmatpush2.msra.mxu0 0.0
    %529 = vmatprep.subr.mxu0 0.0
    %530 = vmatpush2.msra.mxu0 0.0
    %531 = vmatprep.subr.mxu0 0.0
    %532 = vmatpush2.msra.mxu0 0.0
    %533 = vmatprep.subr.mxu0 0.0
    %534 = vmatpush2.msra.mxu0 0.0
    %535 = vmatprep.subr.mxu0 0.0
    %536 = vmatpush2.msra.mxu0 0.0
    %537 = vmatprep.subr.mxu0 0.0
    %538 = vmatpush2.msra.mxu0 0.0
    %539 = vmatprep.subr.mxu0 0.0
    %540 = vmatpush2.msra.mxu0 0.0
    %541 = vmatprep.subr.mxu0 0.0
    %542 = vmatpush2.msra.mxu0 0.0
    %543 = vmatprep.subr.mxu0 0.0
    %544 = vmatpush2.msra.mxu0 0.0
    %545 = vmatprep.subr.mxu0 0.0
    %546 = vmatpush2.msra.mxu0 0.0
    %547 = vmatprep.mubr.f32.mxu0 0.0
    %548 = vmatmul.mubr.f32.gmra.mxu0 %v478
    %v549 = vpop.f32.mrf.mxu0
    %v550 = vadd.f32 0.0, %v549
    %v551 = vpop.f32.mrf.mxu0
    %552 = vdwg.mxu0
    %v553 = vrot.slane %v209, 5
    %v555 = vsel %vm431, %v209, %v553
    %v556 = vld [vmem:[#allocation7 + $0x108] sm:$0xff]
    %v557 = vld [vmem:[#allocation7 + $0x118] sm:$0xff]
    %v558 = vld [vmem:[#allocation7 + $0x128] sm:$0xff]
    %v559 = vld [vmem:[#allocation7 + $0x138] sm:$0xff]
    %v560 = vld [vmem:[#allocation7 + $0x148] sm:$0xff]
    %v561 = vld [vmem:[#allocation7 + $0x158] sm:$0xff]
    %v562 = vld [vmem:[#allocation7 + $0x168] sm:$0xff]
    %v563 = vld [vmem:[#allocation7 + $0x178] sm:$0xff]
    %v564 = vld [vmem:[#allocation7 + $0x230] ss:$0 sm:$0xff]
    %v566 = vsel %vm56, %v550, 0
    %568 = vmatprep.subr.mxu0 0.0
    %569 = vmatpush1.msra.mxu0 0.0
    %570 = vmatprep.subr.mxu0 0.0
    %571 = vmatpush1.msra.mxu0 0.0
    %572 = vmatprep.subr.mxu0 0.0
    %573 = vmatpush1.msra.mxu0 0.0
    %574 = vmatprep.subr.mxu0 0.0
    %575 = vmatpush1.msra.mxu0 0.0
    %576 = vmatprep.subr.mxu0 0.0
    %577 = vmatpush1.msra.mxu0 0.0
    %578 = vmatprep.subr.mxu0 0.0
    %579 = vmatpush1.msra.mxu0 0.0
    %580 = vmatprep.subr.mxu0 0.0
    %581 = vmatpush1.msra.mxu0 0.0
    %582 = vmatprep.subr.mxu0 0.0
    %583 = vmatpush1.msra.mxu0 0.0
    %584 = vmatprep.subr.mxu0 0.0
    %585 = vmatpush1.msra.mxu0 %v563
    %586 = vmatprep.subr.mxu0 0.0
    %587 = vmatpush1.msra.mxu0 %v562
    %588 = vmatprep.subr.mxu0 0.0
    %589 = vmatpush1.msra.mxu0 %v561
    %590 = vmatprep.subr.mxu0 0.0
    %591 = vmatpush1.msra.mxu0 %v560
    %592 = vmatprep.subr.mxu0 0.0
    %593 = vmatpush1.msra.mxu0 %v559
    %594 = vmatprep.subr.mxu0 0.0
    %595 = vmatpush1.msra.mxu0 %v558
    %596 = vmatprep.subr.mxu0 0.0
    %597 = vmatpush1.msra.mxu0 %v557
    %598 = vmatprep.subr.mxu0 0.0
    %599 = vmatpush1.msra.mxu0 %v556
    %600 = vmatprep.subr.mxu0 0.0
    %601 = vmatpush2.msra.mxu0 0.0
    %602 = vmatprep.subr.mxu0 0.0
    %603 = vmatpush2.msra.mxu0 0.0
    %604 = vmatprep.subr.mxu0 0.0
    %605 = vmatpush2.msra.mxu0 0.0
    %606 = vmatprep.subr.mxu0 0.0
    %607 = vmatpush2.msra.mxu0 0.0
    %608 = vmatprep.subr.mxu0 0.0
    %609 = vmatpush2.msra.mxu0 0.0
    %610 = vmatprep.subr.mxu0 0.0
    %611 = vmatpush2.msra.mxu0 0.0
    %612 = vmatprep.subr.mxu0 0.0
    %613 = vmatpush2.msra.mxu0 0.0
    %614 = vmatprep.subr.mxu0 0.0
    %615 = vmatpush2.msra.mxu0 0.0
    %616 = vmatprep.subr.mxu0 0.0
    %617 = vmatpush2.msra.mxu0 0.0
    %618 = vmatprep.subr.mxu0 0.0
    %619 = vmatpush2.msra.mxu0 0.0
    %620 = vmatprep.subr.mxu0 0.0
    %621 = vmatpush2.msra.mxu0 0.0
    %622 = vmatprep.subr.mxu0 0.0
    %623 = vmatpush2.msra.mxu0 0.0
    %624 = vmatprep.subr.mxu0 0.0
    %625 = vmatpush2.msra.mxu0 0.0
    %626 = vmatprep.subr.mxu0 0.0
    %627 = vmatpush2.msra.mxu0 0.0
    %628 = vmatprep.subr.mxu0 0.0
    %629 = vmatpush2.msra.mxu0 0.0
    %630 = vmatprep.subr.mxu0 0.0
    %631 = vmatpush2.msra.mxu0 0.0
    %632 = vmatprep.mubr.f32.mxu0 0.0
    %633 = vmatmul.mubr.f32.gmra.mxu0 %v566
    %v634 = vpop.f32.mrf.mxu0
    %v635 = vadd.f32 %v564, %v634
    %v636 = vpop.f32.mrf.mxu0
    %637 = vdwg.mxu0
    %v638 = vadd.f32 %v635, %v555
    %vm639 = vcmask 521216
    %v640 = vsel %vm639, %v638, 0.0
    %641 = vadd.xlane.f32.xlu0 %v640
    %v642 = vpop.xlane.xlu0 %641
    %v643 = vrcp.pop 64.0
    %v644 = vmul.f32 %v642, %v643
    %v645 = vsub.f32 %v638, %v644
    %v646 = vmul.f32 %v645, %v645
    %v647 = vsel %vm639, %v646, 0.0
    %648 = vadd.xlane.f32.xlu0 %v647
    %v649 = vpop.xlane.xlu0 %648
    %v650 = vmul.f32 %v649, %v643
    %v651 = vadd.f32 %v650, 1e-05
    %v652 = vrsqrt.pop %v651
    %v653 = vmul.f32 %v645, %v652
    %v654 = vld [vmem:[#allocation7 + $0x240] ss:$0 sm:$0xff]
    %v655 = vmul.f32 %v653, %v654
    %v656 = vld [vmem:[#allocation7 + $0x248] ss:$0 sm:$0xff]
    %v657 = vadd.f32 %v655, %v656
    %v658 = vld [vmem:[#allocation7 + $0x80] sm:$0xff]
    %v659 = vld [vmem:[#allocation7 + $0x88] sm:$0xff]
    %v660 = vld [vmem:[#allocation7 + $0x90] sm:$0xff]
    %v661 = vld [vmem:[#allocation7 + $0x98] sm:$0xff]
    %v662 = vld [vmem:[#allocation7 + $0xa0] sm:$0xff]
    %v663 = vld [vmem:[#allocation7 + $0xa8] sm:$0xff]
    %v664 = vld [vmem:[#allocation7 + $0xb0] sm:$0xff]
    %v665 = vld [vmem:[#allocation7 + $0xb8] sm:$0xff]
    %v666 = vld [vmem:[#allocation7 + $0xc0] sm:$0xff]
    %v667 = vld [vmem:[#allocation7 + $0xc8] sm:$0xff]
    %v668 = vld [vmem:[#allocation7 + $0xd0] sm:$0xff]
    %v669 = vld [vmem:[#allocation7 + $0xd8] sm:$0xff]
    %v670 = vld [vmem:[#allocation7 + $0xe0] sm:$0xff]
    %v671 = vld [vmem:[#allocation7 + $0xe8] sm:$0xff]
    %v672 = vld [vmem:[#allocation7 + $0xf0] sm:$0xff]
    %v673 = vld [vmem:[#allocation7 + $0xf8] sm:$0xff]
    %s674 = scalar_lea.vmem [#allocation7], 528
    %v675 = vld [vmem:[%s674] ss:$8 sm:$0x3]
    %v677 = vlaneseq
    %v678 = vshrl.u32 %v677, 7
    %v679 = vsub.s32 0, %v678
    %v680 = vrot.slane %v675, %v679
    %v681 = vlaneseq
    %v682 = vshrl.u32 %v681, 7
    %v683 = vsub.s32 1, %v682
    %v684 = vrot.slane %v675, %v683
    %v688 = vsel %vm56, %v657, 0
    %690 = vmatprep.subr.mxu0 0.0
    %691 = vmatpush1.msra.mxu0 0.0
    %692 = vmatprep.subr.mxu0 0.0
    %693 = vmatpush1.msra.mxu0 0.0
    %694 = vmatprep.subr.mxu0 0.0
    %695 = vmatpush1.msra.mxu0 0.0
    %696 = vmatprep.subr.mxu0 0.0
    %697 = vmatpush1.msra.mxu0 0.0
    %698 = vmatprep.subr.mxu0 0.0
    %699 = vmatpush1.msra.mxu0 0.0
    %700 = vmatprep.subr.mxu0 0.0
    %701 = vmatpush1.msra.mxu0 0.0
    %702 = vmatprep.subr.mxu0 0.0
    %703 = vmatpush1.msra.mxu0 0.0
    %704 = vmatprep.subr.mxu0 0.0
    %705 = vmatpush1.msra.mxu0 0.0
    %706 = vmatprep.subr.mxu0 %v673
    %707 = vmatpush1.msra.mxu0 %v672
    %708 = vmatprep.subr.mxu0 %v671
    %709 = vmatpush1.msra.mxu0 %v670
    %710 = vmatprep.subr.mxu0 %v669
    %711 = vmatpush1.msra.mxu0 %v668
    %712 = vmatprep.subr.mxu0 %v667
    %713 = vmatpush1.msra.mxu0 %v666
    %714 = vmatprep.subr.mxu0 %v665
    %715 = vmatpush1.msra.mxu0 %v664
    %716 = vmatprep.subr.mxu0 %v663
    %717 = vmatpush1.msra.mxu0 %v662
    %718 = vmatprep.subr.mxu0 %v661
    %719 = vmatpush1.msra.mxu0 %v660
    %720 = vmatprep.subr.mxu0 %v659
    %721 = vmatpush1.msra.mxu0 %v658
    %722 = vmatprep.subr.mxu0 0.0
    %723 = vmatpush2.msra.mxu0 0.0
    %724 = vmatprep.subr.mxu0 0.0
    %725 = vmatpush2.msra.mxu0 0.0
    %726 = vmatprep.subr.mxu0 0.0
    %727 = vmatpush2.msra.mxu0 0.0
    %728 = vmatprep.subr.mxu0 0.0
    %729 = vmatpush2.msra.mxu0 0.0
    %730 = vmatprep.subr.mxu0 0.0
    %731 = vmatpush2.msra.mxu0 0.0
    %732 = vmatprep.subr.mxu0 0.0
    %733 = vmatpush2.msra.mxu0 0.0
    %734 = vmatprep.subr.mxu0 0.0
    %735 = vmatpush2.msra.mxu0 0.0
    %736 = vmatprep.subr.mxu0 0.0
    %737 = vmatpush2.msra.mxu0 0.0
    %738 = vmatprep.subr.mxu0 0.0
    %739 = vmatpush2.msra.mxu0 0.0
    %740 = vmatprep.subr.mxu0 0.0
    %741 = vmatpush2.msra.mxu0 0.0
    %742 = vmatprep.subr.mxu0 0.0
    %743 = vmatpush2.msra.mxu0 0.0
    %744 = vmatprep.subr.mxu0 0.0
    %745 = vmatpush2.msra.mxu0 0.0
    %746 = vmatprep.subr.mxu0 0.0
    %747 = vmatpush2.msra.mxu0 0.0
    %748 = vmatprep.subr.mxu0 0.0
    %749 = vmatpush2.msra.mxu0 0.0
    %750 = vmatprep.subr.mxu0 0.0
    %751 = vmatpush2.msra.mxu0 0.0
    %752 = vmatprep.subr.mxu0 0.0
    %753 = vmatpush2.msra.mxu0 0.0
    %754 = vmatprep.mubr.f32.mxu0 0.0
    %755 = vmatmul.mubr.f32.gmra.mxu0 %v688
    %v756 = vpop.f32.mrf.mxu0
    %v757 = vadd.f32 %v680, %v756
    %v758 = vpop.f32.mrf.mxu0
    %v759 = vadd.f32 %v684, %v758
    %760 = vdwg.mxu0
    %v761 = vtanh.pop %v757
    %v762 = vxor.u32 %v757, 2147483648
    %v763 = vmul.f32 %v762, 1.442695
    %v764 = vpow.pop %v763
    %v765 = vadd.f32 %v764, 1.0
    %v766 = vrcp.pop %v765
    %v767 = vmul.f32 1.0, %v766
    %769 = vrot.lane.b32.xlu0 %v767, 96
    %v770 = vpop.permute.xlu0 %769
    %v772 = vmul.f32 %v761, %v770
    %v773 = vld [vmem:[#allocation7 + $0x250] ss:$0 sm:$0xff]
    %v774 = vmul.f32 %v772, %v773
    %vm775 = vcmask 259072
    %v776 = vsel %vm775, %v774, 0.0
    %777 = vadd.xlane.f32.xlu0 %v776
    %v778 = vpop.xlane.xlu0 %777
    %v779 = vld [vmem:[#allocation7 + $0x258] ss:$0 sm:$0xff]
    %v780 = vadd.f32 %v778, %v779
    %v781 = vsel %vm437, %v780, -inf
    %vm782 = vcmask 5120
    %v783 = vsel %vm782, %v781, -inf
    %v784 = vrot.slane %v783, 4
    %v785 = vmax.f32 %v783, %v784
    %v786 = vrot.slane %v785, 2
    %v787 = vmax.f32 %v785, %v786
    %v788 = vrot.slane %v787, 1
    %v789 = vmax.f32 %v787, %v788
    %v790 = vsel %vm437, -inf, %v780
    %v791 = vsel %vm782, %v790, -inf
    %v792 = vrot.slane %v791, 4
    %v793 = vmax.f32 %v791, %v792
    %v794 = vrot.slane %v793, 2
    %v795 = vmax.f32 %v793, %v794
    %v796 = vrot.slane %v795, 1
    %v797 = vmax.f32 %v795, %v796
    %v798 = vsel %vm437, %v789, %v797
    %v799 = vsub.f32 %v780, %v798
    %v800 = vmul.f32 %v799, 1.442695
    %v801 = vpow.pop %v800
    %v802 = vsel %vm437, %v801, 0.0
    %v803 = vsel %vm782, %v802, 0.0
    %v804 = vrot.slane %v803, 4
    %v805 = vadd.f32 %v803, %v804
    %v806 = vrot.slane %v805, 2
    %v807 = vadd.f32 %v805, %v806
    %v808 = vrot.slane %v807, 1
    %v809 = vadd.f32 %v807, %v808
    %v810 = vsel %vm437, 0.0, %v801
    %v811 = vsel %vm782, %v810, 0.0
    %v812 = vrot.slane %v811, 4
    %v813 = vadd.f32 %v811, %v812
    %v814 = vrot.slane %v813, 2
    %v815 = vadd.f32 %v813, %v814
    %v816 = vrot.slane %v815, 1
    %v817 = vadd.f32 %v815, %v816
    %v818 = vrcp.pop %v809
    %v819 = vrcp.pop %v817
    %v820 = vsel %vm437, %v818, %v819
    %v821 = vmul.f32 %v801, %v820
    %823 = vset.pattern.permute.xlu0 0
    %824 = vperm.xlu0 %823, %v821
    %v825 = vpop.permute.xlu0 %824
    %v827 = vmul.f32 %v825, %v657
    %v828 = vsel %vm639, %v827, 0.0
    %v829 = vrot.slane %v828, 4
    %v830 = vadd.f32 %v828, %v829
    %v831 = vrot.slane %v830, 2
    %v832 = vadd.f32 %v830, %v831
    %v833 = vrot.slane %v832, 1
    %v834 = vadd.f32 %v832, %v833
    %v837 = vrot.slane %v322, 5
    %v838 = vrot.slane %v328, 5
    %v839 = vsel %vm431, %v837, %v838
    %840 = vrot.lane.b32.xlu0 %v837, 64
    %v841 = vpop.permute.xlu0 %840
    %842 = vrot.lane.b32.xlu0 %v839, 64
    %v843 = vpop.permute.xlu0 %842
    %844 = vrot.lane.b32.xlu0 %v838, 64
    %v845 = vpop.permute.xlu0 %844
    %v848 = vsel %vm431, %v757, %v841
    %v849 = vsel %vm431, %v759, %v841
    %851 = vrot.lane.b32.xlu0 %v848, 64
    %v852 = vpop.permute.xlu0 %851
    %853 = vrot.lane.b32.xlu0 %v843, 64
    %v854 = vpop.permute.xlu0 %853
    %855 = vrot.lane.b32.xlu0 %v845, 64
    %v856 = vpop.permute.xlu0 %855
    %v858 = vsel %vm56, %v127, 0
    %v860 = vsel %vm56, %v852, 0
    %v862 = vsel %vm56, %v854, 0
    %v864 = vsel %vm56, %v856, 0
    %866 = vmatprep.subr.mxu0 0.0
    %867 = vmatpush1.xpose.msra.mxu0 0.0
    %868 = vmatprep.subr.mxu0 0.0
    %869 = vmatpush1.xpose.msra.mxu0 0.0
    %870 = vmatprep.subr.mxu0 0.0
    %871 = vmatpush1.xpose.msra.mxu0 0.0
    %872 = vmatprep.subr.mxu0 0.0
    %873 = vmatpush1.xpose.msra.mxu0 0.0
    %874 = vmatprep.subr.mxu0 0.0
    %875 = vmatpush1.xpose.msra.mxu0 0.0
    %876 = vmatprep.subr.mxu0 0.0
    %877 = vmatpush1.xpose.msra.mxu0 0.0
    %878 = vmatprep.subr.mxu0 0.0
    %879 = vmatpush1.xpose.msra.mxu0 0.0
    %880 = vmatprep.subr.mxu0 0.0
    %881 = vmatpush1.xpose.msra.mxu0 0.0
    %882 = vmatprep.subr.mxu0 0.0
    %883 = vmatpush1.xpose.msra.mxu0 0.0
    %884 = vmatprep.subr.mxu0 0.0
    %885 = vmatpush1.xpose.msra.mxu0 0.0
    %886 = vmatprep.subr.mxu0 0.0
    %887 = vmatpush1.xpose.msra.mxu0 0.0
    %888 = vmatprep.subr.mxu0 0.0
    %889 = vmatpush1.xpose.msra.mxu0 0.0
    %890 = vmatprep.subr.mxu0 0.0
    %891 = vmatpush1.xpose.msra.mxu0 0.0
    %892 = vmatprep.subr.mxu0 0.0
    %893 = vmatpush1.xpose.msra.mxu0 %v864
    %894 = vmatprep.subr.mxu0 0.0
    %895 = vmatpush1.xpose.msra.mxu0 %v862
    %896 = vmatprep.subr.mxu0 0.0
    %897 = vmatpush1.xpose.msra.mxu0 %v860
    %898 = vmatprep.subr.mxu0 0.0
    %899 = vmatpush2.xpose.msra.mxu0 0.0
    %900 = vmatprep.subr.mxu0 0.0
    %901 = vmatpush2.xpose.msra.mxu0 0.0
    %902 = vmatprep.subr.mxu0 0.0
    %903 = vmatpush2.xpose.msra.mxu0 0.0
    %904 = vmatprep.subr.mxu0 0.0
    %905 = vmatpush2.xpose.msra.mxu0 0.0
    %906 = vmatprep.subr.mxu0 0.0
    %907 = vmatpush2.xpose.msra.mxu0 0.0
    %908 = vmatprep.subr.mxu0 0.0
    %909 = vmatpush2.xpose.msra.mxu0 0.0
    %910 = vmatprep.subr.mxu0 0.0
    %911 = vmatpush2.xpose.msra.mxu0 0.0
    %912 = vmatprep.subr.mxu0 0.0
    %913 = vmatpush2.xpose.msra.mxu0 0.0
    %914 = vmatprep.subr.mxu0 0.0
    %915 = vmatpush2.xpose.msra.mxu0 0.0
    %916 = vmatprep.subr.mxu0 0.0
    %917 = vmatpush2.xpose.msra.mxu0 0.0
    %918 = vmatprep.subr.mxu0 0.0
    %919 = vmatpush2.xpose.msra.mxu0 0.0
    %920 = vmatprep.subr.mxu0 0.0
    %921 = vmatpush2.xpose.msra.mxu0 0.0
    %922 = vmatprep.subr.mxu0 0.0
    %923 = vmatpush2.xpose.msra.mxu0 0.0
    %924 = vmatprep.subr.mxu0 0.0
    %925 = vmatpush2.xpose.msra.mxu0 0.0
    %926 = vmatprep.subr.mxu0 0.0
    %927 = vmatpush2.xpose.msra.mxu0 0.0
    %928 = vmatprep.subr.mxu0 0.0
    %929 = vmatpush2.xpose.msra.mxu0 0.0
    %930 = vmatprep.mubr.f32.mxu0 0.0
    %931 = vmatmul.mubr.f32.gmra.mxu0 %v858
    %v932 = vpop.f32.mrf.mxu0
    %v933 = vadd.f32 0.0, %v932
    %v934 = vpop.f32.mrf.mxu0
    %935 = vdwg.mxu0
    %v936 = vmul.f32 %v933, 0.125
    %vm937 = vcmp.lt.s32.totalorder %v436, 3
    %v938 = vsel %vm937, 0.6931472, 0.0
    %v939 = vadd.f32 %v936, %v938
    %vm940 = vcmask 149504
    %v941 = vsel %vm940, %v939, -inf
    %942 = vmax.xlane.f32.xlu0 %v941
    %v943 = vpop.xlane.xlu0 %942
    %v944 = vsub.f32 %v939, %v943
    %v945 = vmul.f32 %v944, 1.442695
    %v946 = vpow.pop %v945
    %v947 = vsel %vm940, %v946, 0.0
    %948 = vadd.xlane.f32.xlu0 %v947
    %v949 = vpop.xlane.xlu0 %948
    %v950 = vrcp.pop %v949
    %v951 = vmul.f32 %v946, %v950
    %vm952 = vcmask 154624
    %v954 = vsel %vm952, %v951, 0
    %v956 = vsel %vm431, %v845, 0
    %958 = vmatprep.subr.mxu0 0.0
    %959 = vmatpush1.msra.mxu0 0.0
    %960 = vmatprep.subr.mxu0 0.0
    %961 = vmatpush1.msra.mxu0 0.0
    %962 = vmatprep.subr.mxu0 0.0
    %963 = vmatpush1.msra.mxu0 0.0
    %964 = vmatprep.subr.mxu0 0.0
    %965 = vmatpush1.msra.mxu0 0.0
    %966 = vmatprep.subr.mxu0 0.0
    %967 = vmatpush1.msra.mxu0 0.0
    %968 = vmatprep.subr.mxu0 0.0
    %969 = vmatpush1.msra.mxu0 0.0
    %970 = vmatprep.subr.mxu0 0.0
    %971 = vmatpush1.msra.mxu0 0.0
    %972 = vmatprep.subr.mxu0 0.0
    %973 = vmatpush1.msra.mxu0 0.0
    %974 = vmatprep.subr.mxu0 0.0
    %975 = vmatpush1.msra.mxu0 0.0
    %976 = vmatprep.subr.mxu0 0.0
    %977 = vmatpush1.msra.mxu0 0.0
    %978 = vmatprep.subr.mxu0 0.0
    %979 = vmatpush1.msra.mxu0 0.0
    %980 = vmatprep.subr.mxu0 0.0
    %981 = vmatpush1.msra.mxu0 0.0
    %982 = vmatprep.subr.mxu0 0.0
    %983 = vmatpush1.msra.mxu0 0.0
    %984 = vmatprep.subr.mxu0 0.0
    %985 = vmatpush1.msra.mxu0 %v956
    %986 = vmatprep.subr.mxu0 0.0
    %987 = vmatpush1.msra.mxu0 %v843
    %988 = vmatprep.subr.mxu0 0.0
    %989 = vmatpush1.msra.mxu0 %v849
    %990 = vmatprep.subr.mxu0 0.0
    %991 = vmatpush2.msra.mxu0 0.0
    %992 = vmatprep.subr.mxu0 0.0
    %993 = vmatpush2.msra.mxu0 0.0
    %994 = vmatprep.subr.mxu0 0.0
    %995 = vmatpush2.msra.mxu0 0.0
    %996 = vmatprep.subr.mxu0 0.0
    %997 = vmatpush2.msra.mxu0 0.0
    %998 = vmatprep.subr.mxu0 0.0
    %999 = vmatpush2.msra.mxu0 0.0
    %1000 = vmatprep.subr.mxu0 0.0
    %1001 = vmatpush2.msra.mxu0 0.0
    %1002 = vmatprep.subr.mxu0 0.0
    %1003 = vmatpush2.msra.mxu0 0.0
    %1004 = vmatprep.subr.mxu0 0.0
    %1005 = vmatpush2.msra.mxu0 0.0
    %1006 = vmatprep.subr.mxu0 0.0
    %1007 = vmatpush2.msra.mxu0 0.0
    %1008 = vmatprep.subr.mxu0 0.0
    %1009 = vmatpush2.msra.mxu0 0.0
    %1010 = vmatprep.subr.mxu0 0.0
    %1011 = vmatpush2.msra.mxu0 0.0
    %1012 = vmatprep.subr.mxu0 0.0
    %1013 = vmatpush2.msra.mxu0 0.0
    %1014 = vmatprep.subr.mxu0 0.0
    %1015 = vmatpush2.msra.mxu0 0.0
    %1016 = vmatprep.subr.mxu0 0.0
    %1017 = vmatpush2.msra.mxu0 0.0
    %1018 = vmatprep.subr.mxu0 0.0
    %1019 = vmatpush2.msra.mxu0 0.0
    %1020 = vmatprep.subr.mxu0 0.0
    %1021 = vmatpush2.msra.mxu0 0.0
    %1022 = vmatprep.mubr.f32.mxu0 0.0
    %1023 = vmatmul.mubr.f32.gmra.mxu0 %v954
    %v1024 = vpop.f32.mrf.mxu0
    %v1025 = vadd.f32 0.0, %v1024
    %v1026 = vpop.f32.mrf.mxu0
    %1027 = vdwg.mxu0
    %v1028 = vld [vmem:[#allocation7 + $0x180] sm:$0xff]
    %v1029 = vld [vmem:[#allocation7 + $0x190] sm:$0xff]
    %v1030 = vld [vmem:[#allocation7 + $0x1a0] sm:$0xff]
    %v1031 = vld [vmem:[#allocation7 + $0x1b0] sm:$0xff]
    %v1032 = vld [vmem:[#allocation7 + $0x1c0] sm:$0xff]
    %v1033 = vld [vmem:[#allocation7 + $0x1d0] sm:$0xff]
    %v1034 = vld [vmem:[#allocation7 + $0x1e0] sm:$0xff]
    %v1035 = vld [vmem:[#allocation7 + $0x1f0] sm:$0xff]
    %v1036 = vld [vmem:[#allocation7 + $0x238] ss:$0 sm:$0xff]
    %v1038 = vsel %vm56, %v1025, 0
    %1040 = vmatprep.subr.mxu0 0.0
    %1041 = vmatpush1.msra.mxu0 0.0
    %1042 = vmatprep.subr.mxu0 0.0
    %1043 = vmatpush1.msra.mxu0 0.0
    %1044 = vmatprep.subr.mxu0 0.0
    %1045 = vmatpush1.msra.mxu0 0.0
    %1046 = vmatprep.subr.mxu0 0.0
    %1047 = vmatpush1.msra.mxu0 0.0
    %1048 = vmatprep.subr.mxu0 0.0
    %1049 = vmatpush1.msra.mxu0 0.0
    %1050 = vmatprep.subr.mxu0 0.0
    %1051 = vmatpush1.msra.mxu0 0.0
    %1052 = vmatprep.subr.mxu0 0.0
    %1053 = vmatpush1.msra.mxu0 0.0
    %1054 = vmatprep.subr.mxu0 0.0
    %1055 = vmatpush1.msra.mxu0 0.0
    %1056 = vmatprep.subr.mxu0 0.0
    %1057 = vmatpush1.msra.mxu0 %v1035
    %1058 = vmatprep.subr.mxu0 0.0
    %1059 = vmatpush1.msra.mxu0 %v1034
    %1060 = vmatprep.subr.mxu0 0.0
    %1061 = vmatpush1.msra.mxu0 %v1033
    %1062 = vmatprep.subr.mxu0 0.0
    %1063 = vmatpush1.msra.mxu0 %v1032
    %1064 = vmatprep.subr.mxu0 0.0
    %1065 = vmatpush1.msra.mxu0 %v1031
    %1066 = vmatprep.subr.mxu0 0.0
    %1067 = vmatpush1.msra.mxu0 %v1030
    %1068 = vmatprep.subr.mxu0 0.0
    %1069 = vmatpush1.msra.mxu0 %v1029
    %1070 = vmatprep.subr.mxu0 0.0
    %1071 = vmatpush1.msra.mxu0 %v1028
    %1072 = vmatprep.subr.mxu0 0.0
    %1073 = vmatpush2.msra.mxu0 0.0
    %1074 = vmatprep.subr.mxu0 0.0
    %1075 = vmatpush2.msra.mxu0 0.0
    %1076 = vmatprep.subr.mxu0 0.0
    %1077 = vmatpush2.msra.mxu0 0.0
    %1078 = vmatprep.subr.mxu0 0.0
    %1079 = vmatpush2.msra.mxu0 0.0
    %1080 = vmatprep.subr.mxu0 0.0
    %1081 = vmatpush2.msra.mxu0 0.0
    %1082 = vmatprep.subr.mxu0 0.0
    %1083 = vmatpush2.msra.mxu0 0.0
    %1084 = vmatprep.subr.mxu0 0.0
    %1085 = vmatpush2.msra.mxu0 0.0
    %1086 = vmatprep.subr.mxu0 0.0
    %1087 = vmatpush2.msra.mxu0 0.0
    %1088 = vmatprep.subr.mxu0 0.0
    %1089 = vmatpush2.msra.mxu0 0.0
    %1090 = vmatprep.subr.mxu0 0.0
    %1091 = vmatpush2.msra.mxu0 0.0
    %1092 = vmatprep.subr.mxu0 0.0
    %1093 = vmatpush2.msra.mxu0 0.0
    %1094 = vmatprep.subr.mxu0 0.0
    %1095 = vmatpush2.msra.mxu0 0.0
    %1096 = vmatprep.subr.mxu0 0.0
    %1097 = vmatpush2.msra.mxu0 0.0
    %1098 = vmatprep.subr.mxu0 0.0
    %1099 = vmatpush2.msra.mxu0 0.0
    %1100 = vmatprep.subr.mxu0 0.0
    %1101 = vmatpush2.msra.mxu0 0.0
    %1102 = vmatprep.subr.mxu0 0.0
    %1103 = vmatpush2.msra.mxu0 0.0
    %1104 = vmatprep.mubr.f32.mxu0 0.0
    %1105 = vmatmul.mubr.f32.gmra.mxu0 %v1038
    %v1106 = vpop.f32.mrf.mxu0
    %v1107 = vadd.f32 %v1036, %v1106
    %v1108 = vpop.f32.mrf.mxu0
    %1109 = vdwg.mxu0
    %v1110 = vadd.f32 %v1107, %v46
    %v1112 = vsel %vm56, %v834, 0
    %v1115 = vsel %vm56, %v1110, 0
    %1117 = vmatprep.subr.mxu0 0.0
    %1118 = vmatpush1.xpose.msra.mxu0 0.0
    %1119 = vmatprep.subr.mxu0 0.0
    %1120 = vmatpush1.xpose.msra.mxu0 0.0
    %1121 = vmatprep.subr.mxu0 0.0
    %1122 = vmatpush1.xpose.msra.mxu0 0.0
    %1123 = vmatprep.subr.mxu0 0.0
    %1124 = vmatpush1.xpose.msra.mxu0 0.0
    %1125 = vmatprep.subr.mxu0 0.0
    %1126 = vmatpush1.xpose.msra.mxu0 0.0
    %1127 = vmatprep.subr.mxu0 0.0
    %1128 = vmatpush1.xpose.msra.mxu0 0.0
    %1129 = vmatprep.subr.mxu0 0.0
    %1130 = vmatpush1.xpose.msra.mxu0 0.0
    %1131 = vmatprep.subr.mxu0 0.0
    %1132 = vmatpush1.xpose.msra.mxu0 0.0
    %1133 = vmatprep.subr.mxu0 0.0
    %1134 = vmatpush1.xpose.msra.mxu0 0.0
    %1135 = vmatprep.subr.mxu0 0.0
    %1136 = vmatpush1.xpose.msra.mxu0 0.0
    %1137 = vmatprep.subr.mxu0 0.0
    %1138 = vmatpush1.xpose.msra.mxu0 0.0
    %1139 = vmatprep.subr.mxu0 0.0
    %1140 = vmatpush1.xpose.msra.mxu0 0.0
    %1141 = vmatprep.subr.mxu0 0.0
    %1142 = vmatpush1.xpose.msra.mxu0 0.0
    %1143 = vmatprep.subr.mxu0 0.0
    %1144 = vmatpush1.xpose.msra.mxu0 0.0
    %1145 = vmatprep.subr.mxu0 0.0
    %1146 = vmatpush1.xpose.msra.mxu0 0.0
    %1147 = vmatprep.subr.mxu0 0.0
    %1148 = vmatpush1.xpose.msra.mxu0 %v1115
    %1149 = vmatprep.subr.mxu0 0.0
    %1150 = vmatpush2.xpose.msra.mxu0 0.0
    %1151 = vmatprep.subr.mxu0 0.0
    %1152 = vmatpush2.xpose.msra.mxu0 0.0
    %1153 = vmatprep.subr.mxu0 0.0
    %1154 = vmatpush2.xpose.msra.mxu0 0.0
    %1155 = vmatprep.subr.mxu0 0.0
    %1156 = vmatpush2.xpose.msra.mxu0 0.0
    %1157 = vmatprep.subr.mxu0 0.0
    %1158 = vmatpush2.xpose.msra.mxu0 0.0
    %1159 = vmatprep.subr.mxu0 0.0
    %1160 = vmatpush2.xpose.msra.mxu0 0.0
    %1161 = vmatprep.subr.mxu0 0.0
    %1162 = vmatpush2.xpose.msra.mxu0 0.0
    %1163 = vmatprep.subr.mxu0 0.0
    %1164 = vmatpush2.xpose.msra.mxu0 0.0
    %1165 = vmatprep.subr.mxu0 0.0
    %1166 = vmatpush2.xpose.msra.mxu0 0.0
    %1167 = vmatprep.subr.mxu0 0.0
    %1168 = vmatpush2.xpose.msra.mxu0 0.0
    %1169 = vmatprep.subr.mxu0 0.0
    %1170 = vmatpush2.xpose.msra.mxu0 0.0
    %1171 = vmatprep.subr.mxu0 0.0
    %1172 = vmatpush2.xpose.msra.mxu0 0.0
    %1173 = vmatprep.subr.mxu0 0.0
    %1174 = vmatpush2.xpose.msra.mxu0 0.0
    %1175 = vmatprep.subr.mxu0 0.0
    %1176 = vmatpush2.xpose.msra.mxu0 0.0
    %1177 = vmatprep.subr.mxu0 0.0
    %1178 = vmatpush2.xpose.msra.mxu0 0.0
    %1179 = vmatprep.subr.mxu0 0.0
    %1180 = vmatpush2.xpose.msra.mxu0 0.0
    %1181 = vmatprep.mubr.f32.mxu0 0.0
    %1182 = vmatmul.mubr.f32.gmra.mxu0 %v1112
    %v1183 = vpop.f32.mrf.mxu0
    %v1184 = vadd.f32 0.0, %v1183
    %v1185 = vpop.f32.mrf.mxu0
    %1186 = vdwg.mxu0
    %vm1187 = vcmask 16384
    %v1188 = vsel %vm1187, %v1184, -inf
    %1189 = vmax.xlane.f32.xlu0 %v1188
    %v1190 = vpop.xlane.xlu0 %1189
    %v1191 = vsub.f32 %v1184, %v1190
    %v1192 = vmul.f32 %v1191, 1.442695
    %v1193 = vpow.pop %v1192
    %v1194 = vsel %vm1187, %v1193, 0.0
    %1195 = vadd.xlane.f32.xlu0 %v1194
    %v1196 = vpop.xlane.xlu0 %1195
    %v1197 = vrcp.pop %v1196
    %v1198 = vmul.f32 %v1193, %v1197
    %v1199 = vlog2.pop %v1196
    %v1200 = vmul.f32 %v1199, 0.6931472
    %v1201 = vsub.f32 %v1191, %v1200
    %s1202 = sld [smem:[#allocation3]]
    %v1203 = vstv %s1202
    %vm1204 = vcmp.eq.s32.totalorder %v436, %v1203
    %v1205 = vsel %vm1204, %v1201, 0.0
    %v1206 = vsel %vm1187, %v1205, 0.0
    %1207 = vadd.xlane.f32.xlu0 %v1206
    %v1208 = vpop.xlane.xlu0 %1207
    %v1209 = vsub.f32 0.0, %v1208
    %vm1210 = vcmask 23552
    %v1211 = vsel %vm1210, %v1198, %v1209
    %vm1212 = vcmask 31744
    %v1213 = vsel %vm1212, %v1211, 0.0
    %1214 = vst [vmem:[#allocation9] sm:$0x1] %v1213
    // Predicated region
    $region18: #{tpu_custom_call.1} parent=1 // pred_check
      _
    $region19: #{tpu_custom_call.1} parent=1 // pred_check_branch
      %1216 = sbr.rel (0) target = $region21
    $region20: #{tpu_custom_call.1} parent=1 // pred_region
      %s1218 = ssub.s32 16, 16
      %1219 = vsyncadd [#allocation6], %s1218
      %s1221 = sshll.u32 [#allocation9], 4
      %s1222 = int_to_ptr.vmem [resolvable:$true] %s1221
      %1224 = dma.vmem_to_hbm [thread:$0]  %s1222, 16, %s3, [#allocation6]
    $region21: #{tpu_custom_call.1} parent=1 // pred_fallthru
      _
    // Predicated region
    $region22: #{tpu_custom_call.1} parent=1 // pred_check
      _
    $region23: #{tpu_custom_call.1} parent=1 // pred_check_branch
      %1226 = sbr.rel (0) target = $region25
    $region24: #{tpu_custom_call.1} parent=1 // pred_region
      %1227 = dma.done [#allocation6], 16
    $region25: #{tpu_custom_call.1} parent=1 // pred_fallthru
      _
    %1228 = vsyncpa [#allocation5], 1
    %1229 = vsyncpa [#allocation8], 1
    %1230 = vsyncpa [#allocation6], 1

</llo_original>
